<compile_context>
chip_gen: v6e
topology: v6e:2x2x1
jax: 0.10.0
libtpu: 0.0.40
codegen_flags: <defaults>
</compile_context>

<pallas_src>
import jax
import jax.numpy as jnp
from jax.experimental import pallas as pl
from jax.experimental.pallas import tpu as pltpu

B = 4     # number of graphs in the batch
L = 3     # number of fused DeepGCN (res+) layers
N = 256   # number of graph nodes per graph
H = 128   # hidden (feature) dimension
EPS = 1e-5


def deepgcn_resplus_stack_kernel(x_ref, adj_ref, w_ref, prm_ref, o_ref):
    l = pl.program_id(1)

    # Initialize the layer carry with this graph's input node features.
    @pl.when(l == 0)
    def _():
        o_ref[...] = x_ref[...]

    x = o_ref[0]                                     # (N, H) f32 carry = layer input

    # ---- LayerNorm over the feature axis (single-pass mean / variance) ----
    inv_h = 1.0 / H
    s1 = jnp.sum(x, axis=-1, keepdims=True)
    s2 = jnp.sum(x * x, axis=-1, keepdims=True)
    mean = s1 * inv_h
    var = jnp.maximum(s2 * inv_h - mean * mean, 0.0)

    params = prm_ref[0]                              # (3, H) f32: gamma, beta, bias
    gamma = params[0:1]
    beta = params[1:2]
    bias = params[2:3]

    h = (x - mean) * jax.lax.rsqrt(var + EPS) * gamma + beta

    # ---- Activation (ReLU) ----
    h = jnp.maximum(h, 0.0)

    # ---- Dropout p=0.0 (eval) -> identity ----
    # TODO(synk): training-mode dropout (stateful PRNG mask) not emitted since p=0.

    # ---- GraphConv: A_norm @ (h @ W) + b   (bf16 MXU matmuls, f32 accumulation) ----
    hw = jnp.dot(h.astype(jnp.bfloat16), w_ref[0],
                 preferred_element_type=jnp.float32)               # (N, H) f32
    ah = jnp.dot(adj_ref[0], hw.astype(jnp.bfloat16),
                 preferred_element_type=jnp.float32)               # (N, H) f32

    # ---- Res+ skip connection; result becomes the next layer's input ----
    o_ref[0] = x + ah + bias


def deepgcn_resplus_stack(x, adj, w, params):
    b, n, hdim = x.shape
    nlayers = w.shape[0]

    # Cast only the matmul operands to bf16 (halves adj/W DMA traffic); the
    # residual carry, LayerNorm math and MXU accumulation stay in f32.
    adj_bf16 = adj.astype(jnp.bfloat16)
    w_bf16 = w.astype(jnp.bfloat16)

    flops = b * nlayers * (2 * n * n * hdim + 2 * n * hdim * hdim)
    bytes_accessed = (x.size * 4 + adj_bf16.size * 2 + w_bf16.size * 2
                      + params.size * 4 + b * n * hdim * 4)

    return pl.pallas_call(
        deepgcn_resplus_stack_kernel,
        out_shape=jax.ShapeDtypeStruct((b, n, hdim), jnp.float32),
        grid=(b, nlayers),
        in_specs=[
            pl.BlockSpec((1, n, hdim), lambda i, l: (i, 0, 0)),      # x   (per graph, f32)
            pl.BlockSpec((1, n, n), lambda i, l: (i, 0, 0)),         # adj (per graph, bf16)
            pl.BlockSpec((1, hdim, hdim), lambda i, l: (l, 0, 0)),   # W   (per layer, bf16)
            pl.BlockSpec((1, 3, hdim), lambda i, l: (l, 0, 0)),      # gamma/beta/bias
        ],
        out_specs=pl.BlockSpec((1, n, hdim), lambda i, l: (i, 0, 0)),
        compiler_params=pltpu.CompilerParams(
            dimension_semantics=("parallel", "arbitrary")),
        cost_estimate=pl.CostEstimate(
            flops=flops,
            transcendentals=b * nlayers * n,        # per-row rsqrt
            bytes_accessed=bytes_accessed),
    )(x, adj_bf16, w_bf16, params)


def reference(x, adj, w, params):
    # Pure-JAX reference mirroring the kernel's bf16-operand / f32-accumulate matmuls.
    adj_bf16 = adj.astype(jnp.bfloat16)
    out = x
    for l in range(w.shape[0]):
        gamma, beta, bias = params[l, 0:1], params[l, 1:2], params[l, 2:3]
        mean = jnp.mean(out, axis=-1, keepdims=True)
        var = jnp.mean((out - mean) ** 2, axis=-1, keepdims=True)
        h = (out - mean) * jax.lax.rsqrt(var + EPS) * gamma + beta
        h = jnp.maximum(h, 0.0)
        hw = jnp.matmul(h.astype(jnp.bfloat16), w[l].astype(jnp.bfloat16),
                        preferred_element_type=jnp.float32)
        ah = jnp.matmul(adj_bf16, hw.astype(jnp.bfloat16),
                        preferred_element_type=jnp.float32)
        out = out + ah + bias
    return out


if __name__ == "__main__":
    key = jax.random.PRNGKey(0)
    kx, ka, kw, kb = jax.random.split(key, 4)

    x = jax.random.normal(kx, (B, N, H), dtype=jnp.float32)

    # Deterministic sparse-ish adjacency per graph -> add self loops -> symmetric normalize.
    raw = (jax.random.uniform(ka, (B, N, N)) < 0.05).astype(jnp.float32)
    a = jnp.maximum(raw, jnp.swapaxes(raw, -1, -2)) + jnp.eye(N, dtype=jnp.float32)
    deg = jnp.sum(a, axis=-1)
    dinv = jax.lax.rsqrt(deg)
    adj = a * dinv[:, :, None] * dinv[:, None, :]

    # Per-layer GraphConv weight + packed (gamma, beta, bias) LayerNorm/conv params.
    w = jax.random.normal(kw, (L, H, H), dtype=jnp.float32) * (1.0 / jnp.sqrt(H))
    gamma = jnp.ones((L, 1, H), dtype=jnp.float32)
    beta = jnp.zeros((L, 1, H), dtype=jnp.float32)
    bias = jax.random.normal(kb, (L, 1, H), dtype=jnp.float32) * 0.01
    params = jnp.concatenate([gamma, beta, bias], axis=1)    # (L, 3, H)

    out = deepgcn_resplus_stack(x, adj, w, params)
    out = jax.block_until_ready(out)

    ref = reference(x, adj, w, params)
    assert out.shape == (B, N, H) and out.dtype == jnp.float32
    err = float(jnp.max(jnp.abs(out - ref)))
    assert err < 2e-2, f"mismatch vs reference: {err}"

    print("KERNEL_OK")
</pallas_src>

<mosaic_0001>
module attributes {stable_mosaic.version = 11 : i64} {
  func.func @deepgcn_resplus_stack_kernel(%arg0: i32, %arg1: i32, %arg2: memref<1x256x128xf32, #tpu.memory_space<vmem>>, %arg3: memref<1x256x256xbf16, #tpu.memory_space<vmem>>, %arg4: memref<1x128x128xbf16, #tpu.memory_space<vmem>>, %arg5: memref<1x3x128xf32, #tpu.memory_space<vmem>>, %arg6: memref<1x256x128xf32, #tpu.memory_space<vmem>>) attributes {dimension_semantics = [#tpu.dimension_semantics<parallel>, #tpu.dimension_semantics<arbitrary>], iteration_bounds = array<i64: 4, 3>, scalar_prefetch = 0 : i64, scratch_operands = 0 : i64, tpu.core_type = #tpu.core_type<tc>, window_params = [{transform_indices = @transform_0, window_bounds = array<i64: 1, 256, 128>}, {transform_indices = @transform_1, window_bounds = array<i64: 1, 256, 256>}, {transform_indices = @transform_2, window_bounds = array<i64: 1, 128, 128>}, {transform_indices = @transform_3, window_bounds = array<i64: 1, 3, 128>}, {transform_indices = @transform_4, window_bounds = array<i64: 1, 256, 128>}]} {
    %c0_i32 = arith.constant 0 : i32
    %0 = arith.cmpi eq, %arg1, %c0_i32 : i32
    %1 = arith.extui %0 : i1 to i32
    %c0_i32_0 = arith.constant 0 : i32
    %2 = arith.cmpi ne, %1, %c0_i32_0 : i32
    scf.if %2 {
      %c0_23 = arith.constant 0 : index
      %c0_24 = arith.constant 0 : index
      %c0_25 = arith.constant 0 : index
      %50 = vector.load %arg2[%c0_23, %c0_24, %c0_25] : memref<1x256x128xf32, #tpu.memory_space<vmem>>, vector<1x256x128xf32>
      %c0_26 = arith.constant 0 : index
      %c0_27 = arith.constant 0 : index
      %c0_28 = arith.constant 0 : index
      %51 = vector.load %arg6[%c0_26, %c0_27, %c0_28] : memref<1x256x128xf32, #tpu.memory_space<vmem>>, vector<1x256x128xf32>
      tpu.vector_store %arg6[%c0_26, %c0_27, %c0_28], %50 {strides = array<i32>} : memref<1x256x128xf32, #tpu.memory_space<vmem>>, vector<1x256x128xf32>,
    } else {
    }
    %c0 = arith.constant 0 : index
    %c0_1 = arith.constant 0 : index
    %c0_2 = arith.constant 0 : index
    %3 = vector.load %arg6[%c0, %c0_1, %c0_2] : memref<1x256x128xf32, #tpu.memory_space<vmem>>, vector<1x256x128xf32>
    %4 = vector.shape_cast %3 : vector<1x256x128xf32> to vector<256x128xf32>
    %cst = arith.constant dense<0.000000e+00> : vector<256xf32>
    %5 = vector.multi_reduction <add>, %4, %cst [1] : vector<256x128xf32> to vector<256xf32>
    %6 = vector.shape_cast %5 : vector<256xf32> to vector<256x1xf32>
    %7 = arith.mulf %4, %4 : vector<256x128xf32>
    %cst_3 = arith.constant dense<0.000000e+00> : vector<256xf32>
    %8 = vector.multi_reduction <add>, %7, %cst_3 [1] : vector<256x128xf32> to vector<256xf32>
    %9 = vector.shape_cast %8 : vector<256xf32> to vector<256x1xf32>
    %cst_4 = arith.constant 7.812500e-03 : f32
    %10 = vector.broadcast %cst_4 : f32 to vector<256x1xf32>
    %11 = arith.mulf %6, %10 : vector<256x1xf32>
    %cst_5 = arith.constant 7.812500e-03 : f32
    %12 = vector.broadcast %cst_5 : f32 to vector<256x1xf32>
    %13 = arith.mulf %9, %12 : vector<256x1xf32>
    %14 = arith.mulf %11, %11 : vector<256x1xf32>
    %15 = arith.subf %13, %14 : vector<256x1xf32>
    %cst_6 = arith.constant 0.000000e+00 : f32
    %16 = vector.broadcast %cst_6 : f32 to vector<256x1xf32>
    %17 = arith.maximumf %15, %16 : vector<256x1xf32>
    %c0_7 = arith.constant 0 : index
    %c0_8 = arith.constant 0 : index
    %c0_9 = arith.constant 0 : index
    %18 = vector.load %arg5[%c0_7, %c0_8, %c0_9] : memref<1x3x128xf32, #tpu.memory_space<vmem>>, vector<1x3x128xf32>
    %19 = vector.shape_cast %18 : vector<1x3x128xf32> to vector<3x128xf32>
    %20 = vector.extract_strided_slice %19 {offsets = [0, 0], sizes = [1, 128], strides = [1, 1]} : vector<3x128xf32> to vector<1x128xf32>
    %21 = vector.extract_strided_slice %19 {offsets = [1, 0], sizes = [1, 128], strides = [1, 1]} : vector<3x128xf32> to vector<1x128xf32>
    %22 = vector.extract_strided_slice %19 {offsets = [2, 0], sizes = [1, 128], strides = [1, 1]} : vector<3x128xf32> to vector<1x128xf32>
    %23 = vector.broadcast %11 : vector<256x1xf32> to vector<256x128xf32>
    %24 = arith.subf %4, %23 : vector<256x128xf32>
    %cst_10 = arith.constant 9.99999974E-6 : f32
    %25 = vector.broadcast %cst_10 : f32 to vector<256x1xf32>
    %26 = arith.addf %17, %25 : vector<256x1xf32>
    %27 = math.rsqrt %26 : vector<256x1xf32>
    %28 = vector.broadcast %27 : vector<256x1xf32> to vector<256x128xf32>
    %29 = arith.mulf %24, %28 : vector<256x128xf32>
    %30 = vector.broadcast %20 : vector<1x128xf32> to vector<256x128xf32>
    %31 = arith.mulf %29, %30 : vector<256x128xf32>
    %32 = vector.broadcast %21 : vector<1x128xf32> to vector<256x128xf32>
    %33 = arith.addf %31, %32 : vector<256x128xf32>
    %cst_11 = arith.constant 0.000000e+00 : f32
    %34 = vector.broadcast %cst_11 : f32 to vector<256x128xf32>
    %35 = arith.maximumf %33, %34 : vector<256x128xf32>
    %36 = arith.truncf %35 : vector<256x128xf32> to vector<256x128xbf16>
    %c0_12 = arith.constant 0 : index
    %c0_13 = arith.constant 0 : index
    %c0_14 = arith.constant 0 : index
    %37 = vector.load %arg4[%c0_12, %c0_13, %c0_14] : memref<1x128x128xbf16, #tpu.memory_space<vmem>>, vector<1x128x128xbf16>
    %38 = vector.shape_cast %37 : vector<1x128x128xbf16> to vector<128x128xbf16>
    %cst_15 = arith.constant dense<0.000000e+00> : vector<256x128xf32>
    %39 = tpu.matmul %36, %38, %cst_15 {dimension_numbers = #tpu.dot_dimension_numbers<[1], [0], [0], [1], [0, 0, 1, 1], [], []>} : vector<256x128xbf16>, vector<128x128xbf16>, vector<256x128xf32> -> vector<256x128xf32>
    %c0_16 = arith.constant 0 : index
    %c0_17 = arith.constant 0 : index
    %c0_18 = arith.constant 0 : index
    %40 = vector.load %arg3[%c0_16, %c0_17, %c0_18] : memref<1x256x256xbf16, #tpu.memory_space<vmem>>, vector<1x256x256xbf16>
    %41 = vector.shape_cast %40 : vector<1x256x256xbf16> to vector<256x256xbf16>
    %42 = arith.truncf %39 : vector<256x128xf32> to vector<256x128xbf16>
    %cst_19 = arith.constant dense<0.000000e+00> : vector<256x128xf32>
    %43 = tpu.matmul %41, %42, %cst_19 {dimension_numbers = #tpu.dot_dimension_numbers<[1], [0], [0], [1], [0, 0, 1, 1], [], []>} : vector<256x256xbf16>, vector<256x128xbf16>, vector<256x128xf32> -> vector<256x128xf32>
    %44 = arith.addf %4, %43 : vector<256x128xf32>
    %45 = vector.broadcast %22 : vector<1x128xf32> to vector<256x128xf32>
    %46 = arith.addf %44, %45 : vector<256x128xf32>
    %c0_20 = arith.constant 0 : index
    %c0_21 = arith.constant 0 : index
    %c0_22 = arith.constant 0 : index
    %47 = vector.load %arg6[%c0_20, %c0_21, %c0_22] : memref<1x256x128xf32, #tpu.memory_space<vmem>>, vector<1x256x128xf32>
    %48 = vector.shape_cast %47 : vector<1x256x128xf32> to vector<256x128xf32>
    %49 = vector.shape_cast %46 : vector<256x128xf32> to vector<1x256x128xf32>
    tpu.vector_store %arg6[%c0_20, %c0_21, %c0_22], %49 {strides = array<i32>} : memref<1x256x128xf32, #tpu.memory_space<vmem>>, vector<1x256x128xf32>,
    return
  }
  func.func @transform_0(%arg0: i32, %arg1: i32) -> (i32, i32, i32) {
    %c0_i32 = arith.constant 0 : i32
    %c0_i32_0 = arith.constant 0 : i32
    %c0_i32_1 = arith.constant 0 : i32
    return %arg0, %c0_i32, %c0_i32_0 : i32, i32, i32
  }
  func.func @transform_1(%arg0: i32, %arg1: i32) -> (i32, i32, i32) {
    %c0_i32 = arith.constant 0 : i32
    %c0_i32_0 = arith.constant 0 : i32
    %c0_i32_1 = arith.constant 0 : i32
    return %arg0, %c0_i32, %c0_i32_0 : i32, i32, i32
  }
  func.func @transform_2(%arg0: i32, %arg1: i32) -> (i32, i32, i32) {
    %c0_i32 = arith.constant 0 : i32
    %c0_i32_0 = arith.constant 0 : i32
    %c0_i32_1 = arith.constant 0 : i32
    return %arg1, %c0_i32, %c0_i32_0 : i32, i32, i32
  }
  func.func @transform_3(%arg0: i32, %arg1: i32) -> (i32, i32, i32) {
    %c0_i32 = arith.constant 0 : i32
    %c0_i32_0 = arith.constant 0 : i32
    %c0_i32_1 = arith.constant 0 : i32
    return %arg1, %c0_i32, %c0_i32_0 : i32, i32, i32
  }
  func.func @transform_4(%arg0: i32, %arg1: i32) -> (i32, i32, i32) {
    %c0_i32 = arith.constant 0 : i32
    %c0_i32_0 = arith.constant 0 : i32
    %c0_i32_1 = arith.constant 0 : i32
    return %arg0, %c0_i32, %c0_i32_0 : i32, i32, i32
  }
}

</mosaic_0001>

<llo_original>
// kernel: tpu_custom_call.1
$region0: #{tpu_custom_call.1}
  #allocation0 [shape = 'u32[]', space=smem, size = 0x4, offset = 0x4, fixed_abs, tag = 'smem constant byte address 0x4 - core index']
  #allocation1 [shape = 'u32[144,128]{1,0:T(1,128)}', space=vmem, size = 0x12000, scoped, tag = 'internal scratch']
  %s0 = inlined_call_operand.hbm [shape: f32[4,256,128], index: 0, kind: input, shape index: {}]
  %s1 = inlined_call_operand.hbm [shape: bf16[4,256,256], index: 1, kind: input, shape index: {}]
  %s2 = inlined_call_operand.hbm [shape: bf16[3,128,128], index: 2, kind: input, shape index: {}]
  %s3 = inlined_call_operand.hbm [shape: f32[3,3,128], index: 3, kind: input, shape index: {}]
  %s4 = inlined_call_operand.hbm [shape: f32[4,256,128], index: 4, kind: output, shape index: {}]
  %s5 = sld [smem:[#allocation0]]
  $region69: #{tpu_custom_call.1} parent=0
    _
  %s7 = ssub.s32 1, %s5
  %s8 = scalar_select 0, %s7, %s5
  $region1: #{tpu_custom_call.1} parent=0
    #allocation2 [shape = 'u8[262144]{0}', space=vmem, size = 0x40000, scoped, tag = 'input window, operand 0']
    #allocation3 [shape = 's32[2]{0}', space=sflag, size = 0x8, scoped, tag = 'scoped memory for tpu_custom_call.1']
    #allocation4 [shape = 's32[2]{0}', space=sflag, size = 0x8, scoped, tag = 'scoped memory for tpu_custom_call.1']
    #allocation5 [shape = 'u8[262144]{0}', space=vmem, size = 0x40000, scoped, tag = 'input window, operand 1']
    #allocation6 [shape = 's32[2]{0}', space=sflag, size = 0x8, scoped, tag = 'scoped memory for tpu_custom_call.1']
    #allocation7 [shape = 'u8[65536]{0}', space=vmem, size = 0x10000, scoped, tag = 'input window, operand 2']
    #allocation8 [shape = 'u8[4096]{0}', space=vmem, size = 0x1000, scoped, tag = 'input window, operand 3']
    #allocation9 [shape = 's32[2]{0}', space=sflag, size = 0x8, scoped, tag = 'scoped memory for tpu_custom_call.1']
    #allocation10 [shape = 'u8[262144]{0}', space=vmem, size = 0x40000, scoped, tag = 'output window, operand 0']
    %9 = vsyncpa [#allocation3], 0
    %s10 = scalar_lea.sflag [#allocation3], 1
    %11 = vsyncpa %s10, 0
    %12 = vsyncpa [#allocation6], 0
    %s13 = scalar_lea.sflag [#allocation6], 1
    %14 = vsyncpa %s13, 0
    %15 = vsyncpa [#allocation9], 0
    %s16 = scalar_lea.sflag [#allocation9], 1
    %17 = vsyncpa %s16, 0
    %18 = vsyncpa [#allocation4], 0
    %s19 = scalar_lea.sflag [#allocation4], 1
    %20 = vsyncpa %s19, 0
    loop: start=0, step=1, limit=14
    $region2: #{tpu_custom_call.1} parent=1 // loop_pre_header
      _
    $region3: #{tpu_custom_call.1} parent=1 // loop_header
      %s22 = sphi 0, %s26
      %p23 = scmp.ge.s32.totalorder %s22, 14
      %s29 = sphi 0, %s41
      %s30 = sphi 0, %s37
      %s31 = sphi 0, %s29
      %s32 = sphi 0, %s30
      %s33 = sphi 0, %s31
      %s34 = sphi 0, %s32
      %s44 = sphi 0, %s46
      %s47 = sphi 0, %s44
      %s48 = sphi 0, %s47
      %s64 = sphi 0, %s48
      %s70 = sphi 0, %s72
      %s73 = sphi 0, %s70
      %s74 = sphi 0, %s73
      %s90 = sphi 0, %s74
      %s96 = sphi 0, %s98
      %s99 = sphi 0, %s96
      %s100 = sphi 0, %s99
      %s116 = sphi 0, %s100
      %s122 = sphi 0, %s124
      %s125 = sphi 0, %s122
      %s126 = sphi 0, %s125
      %s142 = sphi 0, %s126
      %s148 = sphi 0, %s150
      %s151 = sphi 0, %s148
      %s152 = sphi 0, %s151
      %s168 = sphi 0, %s152
    $region4: #{tpu_custom_call.1} parent=1 // loop_header_branch
      %25 = sbr.rel (%p23) target = $region8
    $region5: #{tpu_custom_call.1} parent=1 // loop_body
      %s27 = ssub.s32 %s22, 1
      %s28 = ssub.s32 %s22, 2
      %s35 = sadd.s32 1, %s30
      %p36 = scmp.ge.s32.totalorder %s35, 3
      %s37 = scalar_select %p36, 0, %s35
      %s38 = sadd.s32 1, %s29
      %s39 = scalar_select %p36, %s38, %s29
      %p40 = scmp.ge.s32.totalorder %s39, 4
      %s41 = scalar_select %p40, 0, %s39
      %s42 = ssub.s32 %s29, %s41
      %p43 = scmp.eq.s32.totalorder %s42, 0
      %s45 = sadd.s32 %s44, 1
      %s46 = scalar_select %p43, %s44, %s45
      %p49 = pneg %p43
      %p50 = scmp.eq.s32.totalorder %s22, 11
      %p51 = por %p49, %p50
      %p52 = scmp.ne.s32.totalorder %s44, %s47
      %p53 = scmp.eq.s32.totalorder %s22, 0
      %p54 = por %p52, %p53
      %p55 = scmp.ne.s32.totalorder %s44, %s47
      %p56 = scmp.eq.s32.totalorder %s27, 11
      %p57 = por %p55, %p56
      %p58 = scmp.ne.s32.totalorder %s47, %s48
      %p59 = scmp.eq.s32.totalorder %s27, 0
      %p60 = por %p58, %p59
      %p61 = scmp.ne.s32.totalorder %s47, %s48
      %p62 = scmp.eq.s32.totalorder %s28, 11
      %p63 = por %p61, %p62
      %p65 = scmp.ne.s32.totalorder %s48, %s64
      %p66 = scmp.eq.s32.totalorder %s28, 0
      %p67 = por %p65, %p66
      %s68 = ssub.s32 %s29, %s41
      %p69 = scmp.eq.s32.totalorder %s68, 0
      %s71 = sadd.s32 %s70, 1
      %s72 = scalar_select %p69, %s70, %s71
      %p75 = pneg %p69
      %p76 = scmp.eq.s32.totalorder %s22, 11
      %p77 = por %p75, %p76
      %p78 = scmp.ne.s32.totalorder %s70, %s73
      %p79 = scmp.eq.s32.totalorder %s22, 0
      %p80 = por %p78, %p79
      %p81 = scmp.ne.s32.totalorder %s70, %s73
      %p82 = scmp.eq.s32.totalorder %s27, 11
      %p83 = por %p81, %p82
      %p84 = scmp.ne.s32.totalorder %s73, %s74
      %p85 = scmp.eq.s32.totalorder %s27, 0
      %p86 = por %p84, %p85
      %p87 = scmp.ne.s32.totalorder %s73, %s74
      %p88 = scmp.eq.s32.totalorder %s28, 11
      %p89 = por %p87, %p88
      %p91 = scmp.ne.s32.totalorder %s74, %s90
      %p92 = scmp.eq.s32.totalorder %s28, 0
      %p93 = por %p91, %p92
      %s94 = ssub.s32 %s30, %s37
      %p95 = scmp.eq.s32.totalorder %s94, 0
      %s97 = sadd.s32 %s96, 1
      %s98 = scalar_select %p95, %s96, %s97
      %p101 = pneg %p95
      %p102 = scmp.eq.s32.totalorder %s22, 11
      %p103 = por %p101, %p102
      %p104 = scmp.ne.s32.totalorder %s96, %s99
      %p105 = scmp.eq.s32.totalorder %s22, 0
      %p106 = por %p104, %p105
      %p107 = scmp.ne.s32.totalorder %s96, %s99
      %p108 = scmp.eq.s32.totalorder %s27, 11
      %p109 = por %p107, %p108
      %p110 = scmp.ne.s32.totalorder %s99, %s100
      %p111 = scmp.eq.s32.totalorder %s27, 0
      %p112 = por %p110, %p111
      %p113 = scmp.ne.s32.totalorder %s99, %s100
      %p114 = scmp.eq.s32.totalorder %s28, 11
      %p115 = por %p113, %p114
      %p117 = scmp.ne.s32.totalorder %s100, %s116
      %p118 = scmp.eq.s32.totalorder %s28, 0
      %p119 = por %p117, %p118
      %s120 = ssub.s32 %s30, %s37
      %p121 = scmp.eq.s32.totalorder %s120, 0
      %s123 = sadd.s32 %s122, 1
      %s124 = scalar_select %p121, %s122, %s123
      %p127 = pneg %p121
      %p128 = scmp.eq.s32.totalorder %s22, 11
      %p129 = por %p127, %p128
      %p130 = scmp.ne.s32.totalorder %s122, %s125
      %p131 = scmp.eq.s32.totalorder %s22, 0
      %p132 = por %p130, %p131
      %p133 = scmp.ne.s32.totalorder %s122, %s125
      %p134 = scmp.eq.s32.totalorder %s27, 11
      %p135 = por %p133, %p134
      %p136 = scmp.ne.s32.totalorder %s125, %s126
      %p137 = scmp.eq.s32.totalorder %s27, 0
      %p138 = por %p136, %p137
      %p139 = scmp.ne.s32.totalorder %s125, %s126
      %p140 = scmp.eq.s32.totalorder %s28, 11
      %p141 = por %p139, %p140
      %p143 = scmp.ne.s32.totalorder %s126, %s142
      %p144 = scmp.eq.s32.totalorder %s28, 0
      %p145 = por %p143, %p144
      %s146 = ssub.s32 %s29, %s41
      %p147 = scmp.eq.s32.totalorder %s146, 0
      %s149 = sadd.s32 %s148, 1
      %s150 = scalar_select %p147, %s148, %s149
      %p153 = pneg %p147
      %p154 = scmp.eq.s32.totalorder %s22, 11
      %p155 = por %p153, %p154
      %p156 = scmp.ne.s32.totalorder %s148, %s151
      %p157 = scmp.eq.s32.totalorder %s22, 0
      %p158 = por %p156, %p157
      %p159 = scmp.ne.s32.totalorder %s148, %s151
      %p160 = scmp.eq.s32.totalorder %s27, 11
      %p161 = por %p159, %p160
      %p162 = scmp.ne.s32.totalorder %s151, %s152
      %p163 = scmp.eq.s32.totalorder %s27, 0
      %p164 = por %p162, %p163
      %p165 = scmp.ne.s32.totalorder %s151, %s152
      %p166 = scmp.eq.s32.totalorder %s28, 11
      %p167 = por %p165, %p166
      %p169 = scmp.ne.s32.totalorder %s152, %s168
      %p170 = scmp.eq.s32.totalorder %s28, 0
      %p171 = por %p169, %p170
      %p172 = scmp.le.s32.totalorder 1, %s22
      %p173 = scmp.lt.s32.totalorder %s22, 13
      %p174 = pnand %p172, %p173
      %p175 = pneg %p174
      // Predicated region
      $region9: #{tpu_custom_call.1} parent=5 // pred_check
        _
      $region10: #{tpu_custom_call.1} parent=5 // pred_check_branch
        %177 = sbr.rel (%p174) target = $region12
      $region11: #{tpu_custom_call.1} parent=5 // pred_region
        %s178 = ssub.s32 %s22, 1
      $region12: #{tpu_custom_call.1} parent=5 // pred_fallthru
        _
      %p179 = scmp.lt.s32.totalorder %s22, 12
      // Predicated region
      $region13: #{tpu_custom_call.1} parent=5 // pred_check
        %p180 = pneg %p179
      $region14: #{tpu_custom_call.1} parent=5 // pred_check_branch
        %182 = sbr.rel (%p180) target = $region16
      $region15: #{tpu_custom_call.1} parent=5 // pred_region
        // Predicated region
        $region17: #{tpu_custom_call.1} parent=15 // pred_check
          %p183 = pneg %p54
        $region18: #{tpu_custom_call.1} parent=15 // pred_check_branch
          %185 = sbr.rel (%p183) target = $region20
        $region19: #{tpu_custom_call.1} parent=15 // pred_region
          %s186 = sand.u32 %s44, 1
          %s187 = scalar_lea.sflag [#allocation3], %s186
          %s188 = sand.u32 %s44, 1
          %s189 = smul.addr %s188, 256
          %s190 = scalar_lea.vmem [#allocation2], %s189
          %s192 = ssub.s32 4096, 4096
          %193 = vsyncadd %s187, %s192
          %s194 = smul.addr %s29, 32
          %s195 = smul.addr %s194, 128
          %s196 = scalar_lea.hbm %s0, %s195
          %s197 = sshll.u32 %s190, 4
          %s198 = int_to_ptr.vmem [resolvable:$true] %s197
          %203 = dma.hbm_to_vmem [thread:$0]  %s196, 4096, %s198, %s187, 128, 128, 8
        $region20: #{tpu_custom_call.1} parent=15 // pred_fallthru
          _
        // Predicated region
        $region21: #{tpu_custom_call.1} parent=15 // pred_check
          %p204 = pneg %p80
        $region22: #{tpu_custom_call.1} parent=15 // pred_check_branch
          %206 = sbr.rel (%p204) target = $region24
        $region23: #{tpu_custom_call.1} parent=15 // pred_region
          %s207 = sand.u32 %s22, 1
          %s208 = scalar_lea.sflag [#allocation6], %s207
          %s209 = sand.u32 %s70, 1
          %s210 = smul.addr %s209, 256
          %s211 = scalar_lea.vmem [#allocation5], %s210
          %s213 = ssub.s32 4096, 4096
          %214 = vsyncadd %s208, %s213
          %s215 = smul.addr %s29, 64
          %s216 = smul.addr %s215, 64
          %s217 = scalar_lea.hbm %s1, %s216
          %s218 = sshll.u32 %s211, 4
          %s219 = int_to_ptr.vmem [resolvable:$true] %s218
          %224 = dma.hbm_to_vmem [thread:$0]  %s217, 4096, %s219, %s208, 128, 128, 8
        $region24: #{tpu_custom_call.1} parent=15 // pred_fallthru
          _
        // Predicated region
        $region25: #{tpu_custom_call.1} parent=15 // pred_check
          %p225 = pneg %p106
        $region26: #{tpu_custom_call.1} parent=15 // pred_check_branch
          %227 = sbr.rel (%p225) target = $region28
        $region27: #{tpu_custom_call.1} parent=15 // pred_region
          %s228 = sand.u32 %s22, 1
          %s229 = scalar_lea.sflag [#allocation6], %s228
          %s230 = sand.u32 %s96, 1
          %s231 = smul.addr %s230, 64
          %s232 = scalar_lea.vmem [#allocation7], %s231
          %s234 = ssub.s32 1024, 1024
          %235 = vsyncadd %s229, %s234
          %s236 = smul.addr %s30, 16
          %s237 = smul.addr %s236, 64
          %s238 = scalar_lea.hbm %s2, %s237
          %s239 = sshll.u32 %s232, 4
          %s240 = int_to_ptr.vmem [resolvable:$true] %s239
          %245 = dma.hbm_to_vmem [thread:$0]  %s238, 1024, %s240, %s229, 64, 64, 4
        $region28: #{tpu_custom_call.1} parent=15 // pred_fallthru
          _
        // Predicated region
        $region29: #{tpu_custom_call.1} parent=15 // pred_check
          %p246 = pneg %p132
        $region30: #{tpu_custom_call.1} parent=15 // pred_check_branch
          %248 = sbr.rel (%p246) target = $region32
        $region31: #{tpu_custom_call.1} parent=15 // pred_region
          %s249 = sand.u32 %s122, 1
          %s250 = scalar_lea.sflag [#allocation9], %s249
          %s251 = sand.u32 %s122, 1
          %s252 = smul.addr %s251, 4
          %s253 = scalar_lea.vmem [#allocation8], %s252
          %s255 = ssub.s32 64, 64
          %256 = vsyncadd %s250, %s255
          %s257 = smul.addr %s30, 64
          %s258 = scalar_lea.hbm %s3, %s257
          %s260 = sshll.u32 %s253, 4
          %s261 = int_to_ptr.vmem [resolvable:$true] %s260
          %263 = dma.hbm_to_vmem [thread:$0]  %s258, 64, %s261, %s250
        $region32: #{tpu_custom_call.1} parent=15 // pred_fallthru
          _
      $region16: #{tpu_custom_call.1} parent=5 // pred_fallthru
        _
      %p264 = scmp.le.s32.totalorder 1, %s22
      %p265 = scmp.lt.s32.totalorder %s22, 13
      %p266 = pnand %p264, %p265
      %p267 = pneg %p266
      // Predicated region
      $region33: #{tpu_custom_call.1} parent=5 // pred_check
        _
      $region34: #{tpu_custom_call.1} parent=5 // pred_check_branch
        %269 = sbr.rel (%p266) target = $region36
      $region35: #{tpu_custom_call.1} parent=5 // pred_region
        %s270 = ssub.s32 %s22, 1
        %s271 = sand.u32 %s47, 1
        %s272 = scalar_lea.sflag [#allocation3], %s271
        %s273 = sand.u32 %s47, 1
        %s274 = smul.addr %s273, 256
        %s275 = scalar_lea.vmem [#allocation2], %s274
        // Predicated region
        $region37: #{tpu_custom_call.1} parent=35 // pred_check
          %p276 = pneg %p60
        $region38: #{tpu_custom_call.1} parent=35 // pred_check_branch
          %278 = sbr.rel (%p276) target = $region40
        $region39: #{tpu_custom_call.1} parent=35 // pred_region
          %279 = dma.done %s272, 4096
        $region40: #{tpu_custom_call.1} parent=35 // pred_fallthru
          _
        %s280 = sand.u32 %s27, 1
        %s281 = scalar_lea.sflag [#allocation6], %s280
        %s282 = sand.u32 %s73, 1
        %s283 = smul.addr %s282, 256
        %s284 = scalar_lea.vmem [#allocation5], %s283
        // Predicated region
        $region41: #{tpu_custom_call.1} parent=35 // pred_check
          %p285 = pneg %p86
        $region42: #{tpu_custom_call.1} parent=35 // pred_check_branch
          %287 = sbr.rel (%p285) target = $region44
        $region43: #{tpu_custom_call.1} parent=35 // pred_region
          %288 = dma.done %s281, 4096
        $region44: #{tpu_custom_call.1} parent=35 // pred_fallthru
          _
        %s289 = sand.u32 %s27, 1
        %s290 = scalar_lea.sflag [#allocation6], %s289
        %s291 = sand.u32 %s99, 1
        %s292 = smul.addr %s291, 64
        %s293 = scalar_lea.vmem [#allocation7], %s292
        // Predicated region
        $region45: #{tpu_custom_call.1} parent=35 // pred_check
          %p294 = pneg %p112
        $region46: #{tpu_custom_call.1} parent=35 // pred_check_branch
          %296 = sbr.rel (%p294) target = $region48
        $region47: #{tpu_custom_call.1} parent=35 // pred_region
          %297 = dma.done %s290, 1024
        $region48: #{tpu_custom_call.1} parent=35 // pred_fallthru
          _
        %s298 = sand.u32 %s125, 1
        %s299 = scalar_lea.sflag [#allocation9], %s298
        %s300 = sand.u32 %s125, 1
        %s301 = smul.addr %s300, 4
        %s302 = scalar_lea.vmem [#allocation8], %s301
        // Predicated region
        $region49: #{tpu_custom_call.1} parent=35 // pred_check
          %p303 = pneg %p138
        $region50: #{tpu_custom_call.1} parent=35 // pred_check_branch
          %305 = sbr.rel (%p303) target = $region52
        $region51: #{tpu_custom_call.1} parent=35 // pred_region
          %306 = dma.done %s299, 64
        $region52: #{tpu_custom_call.1} parent=35 // pred_fallthru
          _
        %s307 = sand.u32 %s47, 1
        %s308 = scalar_lea.sflag [#allocation3], %s307
        %s309 = sand.u32 %s47, 1
        %s310 = smul.addr %s309, 256
        %s311 = scalar_lea.vmem [#allocation2], %s310
        %p312 = pneg %p60
        %p313 = pneg %p57
        %s314 = sand.u32 %s27, 1
        %s315 = scalar_lea.sflag [#allocation6], %s314
        %s316 = sand.u32 %s73, 1
        %s317 = smul.addr %s316, 256
        %s318 = scalar_lea.vmem [#allocation5], %s317
        %p319 = pneg %p86
        %p320 = pneg %p83
        %s321 = sand.u32 %s27, 1
        %s322 = scalar_lea.sflag [#allocation6], %s321
        %s323 = sand.u32 %s99, 1
        %s324 = smul.addr %s323, 64
        %s325 = scalar_lea.vmem [#allocation7], %s324
        %p326 = pneg %p112
        %p327 = pneg %p109
        %s328 = sand.u32 %s125, 1
        %s329 = scalar_lea.sflag [#allocation9], %s328
        %s330 = sand.u32 %s125, 1
        %s331 = smul.addr %s330, 4
        %s332 = scalar_lea.vmem [#allocation8], %s331
        %p333 = pneg %p138
        %p334 = pneg %p135
        %p335 = pneg %p164
        %p336 = pneg %p161
        %s337 = sand.u32 %s151, 1
        %s338 = scalar_lea.sflag [#allocation4], %s337
        %s339 = sand.u32 %s151, 1
        %s340 = smul.addr %s339, 256
        %s341 = scalar_lea.vmem [#allocation10], %s340
        %p343 = scmp.eq.s32.totalorder %s32, 0
        // Predicated region
        $region53: #{tpu_custom_call.1} parent=35 // pred_check
          %p344 = pneg %p343
        $region54: #{tpu_custom_call.1} parent=35 // pred_check_branch
          %346 = sbr.rel (%p344) target = $region56
        $region55: #{tpu_custom_call.1} parent=35 // pred_region
          %v347 = vld [vmem:[%s275] sm:$0xff]
          %v348 = vld [vmem:[%s275 + $0x8] sm:$0xff]
          %v349 = vld [vmem:[%s275 + $0x10] sm:$0xff]
          %v350 = vld [vmem:[%s275 + $0x18] sm:$0xff]
          %v351 = vld [vmem:[%s275 + $0x20] sm:$0xff]
          %v352 = vld [vmem:[%s275 + $0x28] sm:$0xff]
          %v353 = vld [vmem:[%s275 + $0x30] sm:$0xff]
          %v354 = vld [vmem:[%s275 + $0x38] sm:$0xff]
          %v355 = vld [vmem:[%s275 + $0x40] sm:$0xff]
          %v356 = vld [vmem:[%s275 + $0x48] sm:$0xff]
          %v357 = vld [vmem:[%s275 + $0x50] sm:$0xff]
          %v358 = vld [vmem:[%s275 + $0x58] sm:$0xff]
          %v359 = vld [vmem:[%s275 + $0x60] sm:$0xff]
          %v360 = vld [vmem:[%s275 + $0x68] sm:$0xff]
          %v361 = vld [vmem:[%s275 + $0x70] sm:$0xff]
          %v362 = vld [vmem:[%s275 + $0x78] sm:$0xff]
          %v363 = vld [vmem:[%s275 + $0x80] sm:$0xff]
          %v364 = vld [vmem:[%s275 + $0x88] sm:$0xff]
          %v365 = vld [vmem:[%s275 + $0x90] sm:$0xff]
          %v366 = vld [vmem:[%s275 + $0x98] sm:$0xff]
          %v367 = vld [vmem:[%s275 + $0xa0] sm:$0xff]
          %v368 = vld [vmem:[%s275 + $0xa8] sm:$0xff]
          %v369 = vld [vmem:[%s275 + $0xb0] sm:$0xff]
          %v370 = vld [vmem:[%s275 + $0xb8] sm:$0xff]
          %v371 = vld [vmem:[%s275 + $0xc0] sm:$0xff]
          %v372 = vld [vmem:[%s275 + $0xc8] sm:$0xff]
          %v373 = vld [vmem:[%s275 + $0xd0] sm:$0xff]
          %v374 = vld [vmem:[%s275 + $0xd8] sm:$0xff]
          %v375 = vld [vmem:[%s275 + $0xe0] sm:$0xff]
          %v376 = vld [vmem:[%s275 + $0xe8] sm:$0xff]
          %v377 = vld [vmem:[%s275 + $0xf0] sm:$0xff]
          %v378 = vld [vmem:[%s275 + $0xf8] sm:$0xff]
          %379 = vst [vmem:[%s341] sm:$0xff] %v347
          %380 = vst [vmem:[%s341 + $0x8] sm:$0xff] %v348
          %381 = vst [vmem:[%s341 + $0x10] sm:$0xff] %v349
          %382 = vst [vmem:[%s341 + $0x18] sm:$0xff] %v350
          %383 = vst [vmem:[%s341 + $0x20] sm:$0xff] %v351
          %384 = vst [vmem:[%s341 + $0x28] sm:$0xff] %v352
          %385 = vst [vmem:[%s341 + $0x30] sm:$0xff] %v353
          %386 = vst [vmem:[%s341 + $0x38] sm:$0xff] %v354
          %387 = vst [vmem:[%s341 + $0x40] sm:$0xff] %v355
          %388 = vst [vmem:[%s341 + $0x48] sm:$0xff] %v356
          %389 = vst [vmem:[%s341 + $0x50] sm:$0xff] %v357
          %390 = vst [vmem:[%s341 + $0x58] sm:$0xff] %v358
          %391 = vst [vmem:[%s341 + $0x60] sm:$0xff] %v359
          %392 = vst [vmem:[%s341 + $0x68] sm:$0xff] %v360
          %393 = vst [vmem:[%s341 + $0x70] sm:$0xff] %v361
          %394 = vst [vmem:[%s341 + $0x78] sm:$0xff] %v362
          %395 = vst [vmem:[%s341 + $0x80] sm:$0xff] %v363
          %396 = vst [vmem:[%s341 + $0x88] sm:$0xff] %v364
          %397 = vst [vmem:[%s341 + $0x90] sm:$0xff] %v365
          %398 = vst [vmem:[%s341 + $0x98] sm:$0xff] %v366
          %399 = vst [vmem:[%s341 + $0xa0] sm:$0xff] %v367
          %400 = vst [vmem:[%s341 + $0xa8] sm:$0xff] %v368
          %401 = vst [vmem:[%s341 + $0xb0] sm:$0xff] %v369
          %402 = vst [vmem:[%s341 + $0xb8] sm:$0xff] %v370
          %403 = vst [vmem:[%s341 + $0xc0] sm:$0xff] %v371
          %404 = vst [vmem:[%s341 + $0xc8] sm:$0xff] %v372
          %405 = vst [vmem:[%s341 + $0xd0] sm:$0xff] %v373
          %406 = vst [vmem:[%s341 + $0xd8] sm:$0xff] %v374
          %407 = vst [vmem:[%s341 + $0xe0] sm:$0xff] %v375
          %408 = vst [vmem:[%s341 + $0xe8] sm:$0xff] %v376
          %409 = vst [vmem:[%s341 + $0xf0] sm:$0xff] %v377
          %410 = vst [vmem:[%s341 + $0xf8] sm:$0xff] %v378
        $region56: #{tpu_custom_call.1} parent=35 // pred_fallthru
          _
        %v411 = vld [vmem:[%s341] sm:$0xff]
        %v412 = vld [vmem:[%s341 + $0x8] sm:$0xff]
        %v413 = vld [vmem:[%s341 + $0x10] sm:$0xff]
        %v414 = vld [vmem:[%s341 + $0x18] sm:$0xff]
        %v415 = vld [vmem:[%s341 + $0x20] sm:$0xff]
        %v416 = vld [vmem:[%s341 + $0x28] sm:$0xff]
        %v417 = vld [vmem:[%s341 + $0x30] sm:$0xff]
        %v418 = vld [vmem:[%s341 + $0x38] sm:$0xff]
        %v419 = vld [vmem:[%s341 + $0x40] sm:$0xff]
        %v420 = vld [vmem:[%s341 + $0x48] sm:$0xff]
        %v421 = vld [vmem:[%s341 + $0x50] sm:$0xff]
        %v422 = vld [vmem:[%s341 + $0x58] sm:$0xff]
        %v423 = vld [vmem:[%s341 + $0x60] sm:$0xff]
        %v424 = vld [vmem:[%s341 + $0x68] sm:$0xff]
        %v425 = vld [vmem:[%s341 + $0x70] sm:$0xff]
        %v426 = vld [vmem:[%s341 + $0x78] sm:$0xff]
        %v427 = vld [vmem:[%s341 + $0x80] sm:$0xff]
        %v428 = vld [vmem:[%s341 + $0x88] sm:$0xff]
        %v429 = vld [vmem:[%s341 + $0x90] sm:$0xff]
        %v430 = vld [vmem:[%s341 + $0x98] sm:$0xff]
        %v431 = vld [vmem:[%s341 + $0xa0] sm:$0xff]
        %v432 = vld [vmem:[%s341 + $0xa8] sm:$0xff]
        %v433 = vld [vmem:[%s341 + $0xb0] sm:$0xff]
        %v434 = vld [vmem:[%s341 + $0xb8] sm:$0xff]
        %v435 = vld [vmem:[%s341 + $0xc0] sm:$0xff]
        %v436 = vld [vmem:[%s341 + $0xc8] sm:$0xff]
        %v437 = vld [vmem:[%s341 + $0xd0] sm:$0xff]
        %v438 = vld [vmem:[%s341 + $0xd8] sm:$0xff]
        %v439 = vld [vmem:[%s341 + $0xe0] sm:$0xff]
        %v440 = vld [vmem:[%s341 + $0xe8] sm:$0xff]
        %v441 = vld [vmem:[%s341 + $0xf0] sm:$0xff]
        %v442 = vld [vmem:[%s341 + $0xf8] sm:$0xff]
        %443 = vadd.xlane.f32.xlu0 %v411
        %v444 = vpop.xlane.xlu0 %443
        %445 = vadd.xlane.f32.xlu0 %v412
        %v446 = vpop.xlane.xlu0 %445
        %447 = vadd.xlane.f32.xlu0 %v413
        %v448 = vpop.xlane.xlu0 %447
        %449 = vadd.xlane.f32.xlu0 %v414
        %v450 = vpop.xlane.xlu0 %449
        %451 = vadd.xlane.f32.xlu0 %v415
        %v452 = vpop.xlane.xlu0 %451
        %453 = vadd.xlane.f32.xlu0 %v416
        %v454 = vpop.xlane.xlu0 %453
        %455 = vadd.xlane.f32.xlu0 %v417
        %v456 = vpop.xlane.xlu0 %455
        %457 = vadd.xlane.f32.xlu0 %v418
        %v458 = vpop.xlane.xlu0 %457
        %459 = vadd.xlane.f32.xlu0 %v419
        %v460 = vpop.xlane.xlu0 %459
        %461 = vadd.xlane.f32.xlu0 %v420
        %v462 = vpop.xlane.xlu0 %461
        %463 = vadd.xlane.f32.xlu0 %v421
        %v464 = vpop.xlane.xlu0 %463
        %465 = vadd.xlane.f32.xlu0 %v422
        %v466 = vpop.xlane.xlu0 %465
        %467 = vadd.xlane.f32.xlu0 %v423
        %v468 = vpop.xlane.xlu0 %467
        %469 = vadd.xlane.f32.xlu0 %v424
        %v470 = vpop.xlane.xlu0 %469
        %471 = vadd.xlane.f32.xlu0 %v425
        %v472 = vpop.xlane.xlu0 %471
        %473 = vadd.xlane.f32.xlu0 %v426
        %v474 = vpop.xlane.xlu0 %473
        %475 = vadd.xlane.f32.xlu0 %v427
        %v476 = vpop.xlane.xlu0 %475
        %477 = vadd.xlane.f32.xlu0 %v428
        %v478 = vpop.xlane.xlu0 %477
        %479 = vadd.xlane.f32.xlu0 %v429
        %v480 = vpop.xlane.xlu0 %479
        %481 = vadd.xlane.f32.xlu0 %v430
        %v482 = vpop.xlane.xlu0 %481
        %483 = vadd.xlane.f32.xlu0 %v431
        %v484 = vpop.xlane.xlu0 %483
        %485 = vadd.xlane.f32.xlu0 %v432
        %v486 = vpop.xlane.xlu0 %485
        %487 = vadd.xlane.f32.xlu0 %v433
        %v488 = vpop.xlane.xlu0 %487
        %489 = vadd.xlane.f32.xlu0 %v434
        %v490 = vpop.xlane.xlu0 %489
        %491 = vadd.xlane.f32.xlu0 %v435
        %v492 = vpop.xlane.xlu0 %491
        %493 = vadd.xlane.f32.xlu0 %v436
        %v494 = vpop.xlane.xlu0 %493
        %495 = vadd.xlane.f32.xlu0 %v437
        %v496 = vpop.xlane.xlu0 %495
        %497 = vadd.xlane.f32.xlu0 %v438
        %v498 = vpop.xlane.xlu0 %497
        %499 = vadd.xlane.f32.xlu0 %v439
        %v500 = vpop.xlane.xlu0 %499
        %501 = vadd.xlane.f32.xlu0 %v440
        %v502 = vpop.xlane.xlu0 %501
        %503 = vadd.xlane.f32.xlu0 %v441
        %v504 = vpop.xlane.xlu0 %503
        %505 = vadd.xlane.f32.xlu0 %v442
        %v506 = vpop.xlane.xlu0 %505
        %v507 = vmul.f32 %v411, %v411
        %v508 = vmul.f32 %v412, %v412
        %v509 = vmul.f32 %v413, %v413
        %v510 = vmul.f32 %v414, %v414
        %v511 = vmul.f32 %v415, %v415
        %v512 = vmul.f32 %v416, %v416
        %v513 = vmul.f32 %v417, %v417
        %v514 = vmul.f32 %v418, %v418
        %v515 = vmul.f32 %v419, %v419
        %v516 = vmul.f32 %v420, %v420
        %v517 = vmul.f32 %v421, %v421
        %v518 = vmul.f32 %v422, %v422
        %v519 = vmul.f32 %v423, %v423
        %v520 = vmul.f32 %v424, %v424
        %v521 = vmul.f32 %v425, %v425
        %v522 = vmul.f32 %v426, %v426
        %v523 = vmul.f32 %v427, %v427
        %v524 = vmul.f32 %v428, %v428
        %v525 = vmul.f32 %v429, %v429
        %v526 = vmul.f32 %v430, %v430
        %v527 = vmul.f32 %v431, %v431
        %v528 = vmul.f32 %v432, %v432
        %v529 = vmul.f32 %v433, %v433
        %v530 = vmul.f32 %v434, %v434
        %v531 = vmul.f32 %v435, %v435
        %v532 = vmul.f32 %v436, %v436
        %v533 = vmul.f32 %v437, %v437
        %v534 = vmul.f32 %v438, %v438
        %v535 = vmul.f32 %v439, %v439
        %v536 = vmul.f32 %v440, %v440
        %v537 = vmul.f32 %v441, %v441
        %v538 = vmul.f32 %v442, %v442
        %539 = vadd.xlane.f32.xlu0 %v507
        %v540 = vpop.xlane.xlu0 %539
        %541 = vadd.xlane.f32.xlu0 %v508
        %v542 = vpop.xlane.xlu0 %541
        %543 = vadd.xlane.f32.xlu0 %v509
        %v544 = vpop.xlane.xlu0 %543
        %545 = vadd.xlane.f32.xlu0 %v510
        %v546 = vpop.xlane.xlu0 %545
        %547 = vadd.xlane.f32.xlu0 %v511
        %v548 = vpop.xlane.xlu0 %547
        %549 = vadd.xlane.f32.xlu0 %v512
        %v550 = vpop.xlane.xlu0 %549
        %551 = vadd.xlane.f32.xlu0 %v513
        %v552 = vpop.xlane.xlu0 %551
        %553 = vadd.xlane.f32.xlu0 %v514
        %v554 = vpop.xlane.xlu0 %553
        %555 = vadd.xlane.f32.xlu0 %v515
        %v556 = vpop.xlane.xlu0 %555
        %557 = vadd.xlane.f32.xlu0 %v516
        %v558 = vpop.xlane.xlu0 %557
        %559 = vadd.xlane.f32.xlu0 %v517
        %v560 = vpop.xlane.xlu0 %559
        %561 = vadd.xlane.f32.xlu0 %v518
        %v562 = vpop.xlane.xlu0 %561
        %563 = vadd.xlane.f32.xlu0 %v519
        %v564 = vpop.xlane.xlu0 %563
        %565 = vadd.xlane.f32.xlu0 %v520
        %v566 = vpop.xlane.xlu0 %565
        %567 = vadd.xlane.f32.xlu0 %v521
        %v568 = vpop.xlane.xlu0 %567
        %569 = vadd.xlane.f32.xlu0 %v522
        %v570 = vpop.xlane.xlu0 %569
        %571 = vadd.xlane.f32.xlu0 %v523
        %v572 = vpop.xlane.xlu0 %571
        %573 = vadd.xlane.f32.xlu0 %v524
        %v574 = vpop.xlane.xlu0 %573
        %575 = vadd.xlane.f32.xlu0 %v525
        %v576 = vpop.xlane.xlu0 %575
        %577 = vadd.xlane.f32.xlu0 %v526
        %v578 = vpop.xlane.xlu0 %577
        %579 = vadd.xlane.f32.xlu0 %v527
        %v580 = vpop.xlane.xlu0 %579
        %581 = vadd.xlane.f32.xlu0 %v528
        %v582 = vpop.xlane.xlu0 %581
        %583 = vadd.xlane.f32.xlu0 %v529
        %v584 = vpop.xlane.xlu0 %583
        %585 = vadd.xlane.f32.xlu0 %v530
        %v586 = vpop.xlane.xlu0 %585
        %587 = vadd.xlane.f32.xlu0 %v531
        %v588 = vpop.xlane.xlu0 %587
        %589 = vadd.xlane.f32.xlu0 %v532
        %v590 = vpop.xlane.xlu0 %589
        %591 = vadd.xlane.f32.xlu0 %v533
        %v592 = vpop.xlane.xlu0 %591
        %593 = vadd.xlane.f32.xlu0 %v534
        %v594 = vpop.xlane.xlu0 %593
        %595 = vadd.xlane.f32.xlu0 %v535
        %v596 = vpop.xlane.xlu0 %595
        %597 = vadd.xlane.f32.xlu0 %v536
        %v598 = vpop.xlane.xlu0 %597
        %599 = vadd.xlane.f32.xlu0 %v537
        %v600 = vpop.xlane.xlu0 %599
        %601 = vadd.xlane.f32.xlu0 %v538
        %v602 = vpop.xlane.xlu0 %601
        %v603 = vmul.f32 %v444, 0.0078125
        %v604 = vmul.f32 %v446, 0.0078125
        %v605 = vmul.f32 %v448, 0.0078125
        %v606 = vmul.f32 %v450, 0.0078125
        %v607 = vmul.f32 %v452, 0.0078125
        %v608 = vmul.f32 %v454, 0.0078125
        %v609 = vmul.f32 %v456, 0.0078125
        %v610 = vmul.f32 %v458, 0.0078125
        %v611 = vmul.f32 %v460, 0.0078125
        %v612 = vmul.f32 %v462, 0.0078125
        %v613 = vmul.f32 %v464, 0.0078125
        %v614 = vmul.f32 %v466, 0.0078125
        %v615 = vmul.f32 %v468, 0.0078125
        %v616 = vmul.f32 %v470, 0.0078125
        %v617 = vmul.f32 %v472, 0.0078125
        %v618 = vmul.f32 %v474, 0.0078125
        %v619 = vmul.f32 %v476, 0.0078125
        %v620 = vmul.f32 %v478, 0.0078125
        %v621 = vmul.f32 %v480, 0.0078125
        %v622 = vmul.f32 %v482, 0.0078125
        %v623 = vmul.f32 %v484, 0.0078125
        %v624 = vmul.f32 %v486, 0.0078125
        %v625 = vmul.f32 %v488, 0.0078125
        %v626 = vmul.f32 %v490, 0.0078125
        %v627 = vmul.f32 %v492, 0.0078125
        %v628 = vmul.f32 %v494, 0.0078125
        %v629 = vmul.f32 %v496, 0.0078125
        %v630 = vmul.f32 %v498, 0.0078125
        %v631 = vmul.f32 %v500, 0.0078125
        %v632 = vmul.f32 %v502, 0.0078125
        %v633 = vmul.f32 %v504, 0.0078125
        %v634 = vmul.f32 %v506, 0.0078125
        %v635 = vmul.f32 %v540, 0.0078125
        %v636 = vmul.f32 %v542, 0.0078125
        %v637 = vmul.f32 %v544, 0.0078125
        %v638 = vmul.f32 %v546, 0.0078125
        %v639 = vmul.f32 %v548, 0.0078125
        %v640 = vmul.f32 %v550, 0.0078125
        %v641 = vmul.f32 %v552, 0.0078125
        %v642 = vmul.f32 %v554, 0.0078125
        %v643 = vmul.f32 %v556, 0.0078125
        %v644 = vmul.f32 %v558, 0.0078125
        %v645 = vmul.f32 %v560, 0.0078125
        %v646 = vmul.f32 %v562, 0.0078125
        %v647 = vmul.f32 %v564, 0.0078125
        %v648 = vmul.f32 %v566, 0.0078125
        %v649 = vmul.f32 %v568, 0.0078125
        %v650 = vmul.f32 %v570, 0.0078125
        %v651 = vmul.f32 %v572, 0.0078125
        %v652 = vmul.f32 %v574, 0.0078125
        %v653 = vmul.f32 %v576, 0.0078125
        %v654 = vmul.f32 %v578, 0.0078125
        %v655 = vmul.f32 %v580, 0.0078125
        %v656 = vmul.f32 %v582, 0.0078125
        %v657 = vmul.f32 %v584, 0.0078125
        %v658 = vmul.f32 %v586, 0.0078125
        %v659 = vmul.f32 %v588, 0.0078125
        %v660 = vmul.f32 %v590, 0.0078125
        %v661 = vmul.f32 %v592, 0.0078125
        %v662 = vmul.f32 %v594, 0.0078125
        %v663 = vmul.f32 %v596, 0.0078125
        %v664 = vmul.f32 %v598, 0.0078125
        %v665 = vmul.f32 %v600, 0.0078125
        %v666 = vmul.f32 %v602, 0.0078125
        %v667 = vmul.f32 %v603, %v603
        %v668 = vmul.f32 %v604, %v604
        %v669 = vmul.f32 %v605, %v605
        %v670 = vmul.f32 %v606, %v606
        %v671 = vmul.f32 %v607, %v607
        %v672 = vmul.f32 %v608, %v608
        %v673 = vmul.f32 %v609, %v609
        %v674 = vmul.f32 %v610, %v610
        %v675 = vmul.f32 %v611, %v611
        %v676 = vmul.f32 %v612, %v612
        %v677 = vmul.f32 %v613, %v613
        %v678 = vmul.f32 %v614, %v614
        %v679 = vmul.f32 %v615, %v615
        %v680 = vmul.f32 %v616, %v616
        %v681 = vmul.f32 %v617, %v617
        %v682 = vmul.f32 %v618, %v618
        %v683 = vmul.f32 %v619, %v619
        %v684 = vmul.f32 %v620, %v620
        %v685 = vmul.f32 %v621, %v621
        %v686 = vmul.f32 %v622, %v622
        %v687 = vmul.f32 %v623, %v623
        %v688 = vmul.f32 %v624, %v624
        %v689 = vmul.f32 %v625, %v625
        %v690 = vmul.f32 %v626, %v626
        %v691 = vmul.f32 %v627, %v627
        %v692 = vmul.f32 %v628, %v628
        %v693 = vmul.f32 %v629, %v629
        %v694 = vmul.f32 %v630, %v630
        %v695 = vmul.f32 %v631, %v631
        %v696 = vmul.f32 %v632, %v632
        %v697 = vmul.f32 %v633, %v633
        %v698 = vmul.f32 %v634, %v634
        %v699 = vsub.f32 %v635, %v667
        %v700 = vsub.f32 %v636, %v668
        %v701 = vsub.f32 %v637, %v669
        %v702 = vsub.f32 %v638, %v670
        %v703 = vsub.f32 %v639, %v671
        %v704 = vsub.f32 %v640, %v672
        %v705 = vsub.f32 %v641, %v673
        %v706 = vsub.f32 %v642, %v674
        %v707 = vsub.f32 %v643, %v675
        %v708 = vsub.f32 %v644, %v676
        %v709 = vsub.f32 %v645, %v677
        %v710 = vsub.f32 %v646, %v678
        %v711 = vsub.f32 %v647, %v679
        %v712 = vsub.f32 %v648, %v680
        %v713 = vsub.f32 %v649, %v681
        %v714 = vsub.f32 %v650, %v682
        %v715 = vsub.f32 %v651, %v683
        %v716 = vsub.f32 %v652, %v684
        %v717 = vsub.f32 %v653, %v685
        %v718 = vsub.f32 %v654, %v686
        %v719 = vsub.f32 %v655, %v687
        %v720 = vsub.f32 %v656, %v688
        %v721 = vsub.f32 %v657, %v689
        %v722 = vsub.f32 %v658, %v690
        %v723 = vsub.f32 %v659, %v691
        %v724 = vsub.f32 %v660, %v692
        %v725 = vsub.f32 %v661, %v693
        %v726 = vsub.f32 %v662, %v694
        %v727 = vsub.f32 %v663, %v695
        %v728 = vsub.f32 %v664, %v696
        %v729 = vsub.f32 %v665, %v697
        %v730 = vsub.f32 %v666, %v698
        %v731 = vmax.f32 %v699, 0.0
        %v732 = vmax.f32 %v700, 0.0
        %v733 = vmax.f32 %v701, 0.0
        %v734 = vmax.f32 %v702, 0.0
        %v735 = vmax.f32 %v703, 0.0
        %v736 = vmax.f32 %v704, 0.0
        %v737 = vmax.f32 %v705, 0.0
        %v738 = vmax.f32 %v706, 0.0
        %v739 = vmax.f32 %v707, 0.0
        %v740 = vmax.f32 %v708, 0.0
        %v741 = vmax.f32 %v709, 0.0
        %v742 = vmax.f32 %v710, 0.0
        %v743 = vmax.f32 %v711, 0.0
        %v744 = vmax.f32 %v712, 0.0
        %v745 = vmax.f32 %v713, 0.0
        %v746 = vmax.f32 %v714, 0.0
        %v747 = vmax.f32 %v715, 0.0
        %v748 = vmax.f32 %v716, 0.0
        %v749 = vmax.f32 %v717, 0.0
        %v750 = vmax.f32 %v718, 0.0
        %v751 = vmax.f32 %v719, 0.0
        %v752 = vmax.f32 %v720, 0.0
        %v753 = vmax.f32 %v721, 0.0
        %v754 = vmax.f32 %v722, 0.0
        %v755 = vmax.f32 %v723, 0.0
        %v756 = vmax.f32 %v724, 0.0
        %v757 = vmax.f32 %v725, 0.0
        %v758 = vmax.f32 %v726, 0.0
        %v759 = vmax.f32 %v727, 0.0
        %v760 = vmax.f32 %v728, 0.0
        %v761 = vmax.f32 %v729, 0.0
        %v762 = vmax.f32 %v730, 0.0
        %v763 = vld [vmem:[%s302] sm:$0x7]
        %v764 = vsub.f32 %v411, %v603
        %v765 = vsub.f32 %v412, %v604
        %v766 = vsub.f32 %v413, %v605
        %v767 = vsub.f32 %v414, %v606
        %v768 = vsub.f32 %v415, %v607
        %v769 = vsub.f32 %v416, %v608
        %v770 = vsub.f32 %v417, %v609
        %v771 = vsub.f32 %v418, %v610
        %v772 = vsub.f32 %v419, %v611
        %v773 = vsub.f32 %v420, %v612
        %v774 = vsub.f32 %v421, %v613
        %v775 = vsub.f32 %v422, %v614
        %v776 = vsub.f32 %v423, %v615
        %v777 = vsub.f32 %v424, %v616
        %v778 = vsub.f32 %v425, %v617
        %v779 = vsub.f32 %v426, %v618
        %v780 = vsub.f32 %v427, %v619
        %v781 = vsub.f32 %v428, %v620
        %v782 = vsub.f32 %v429, %v621
        %v783 = vsub.f32 %v430, %v622
        %v784 = vsub.f32 %v431, %v623
        %v785 = vsub.f32 %v432, %v624
        %v786 = vsub.f32 %v433, %v625
        %v787 = vsub.f32 %v434, %v626
        %v788 = vsub.f32 %v435, %v627
        %v789 = vsub.f32 %v436, %v628
        %v790 = vsub.f32 %v437, %v629
        %v791 = vsub.f32 %v438, %v630
        %v792 = vsub.f32 %v439, %v631
        %v793 = vsub.f32 %v440, %v632
        %v794 = vsub.f32 %v441, %v633
        %v795 = vsub.f32 %v442, %v634
        %v796 = vadd.f32 %v731, 1e-05
        %v797 = vadd.f32 %v732, 1e-05
        %v798 = vadd.f32 %v733, 1e-05
        %v799 = vadd.f32 %v734, 1e-05
        %v800 = vadd.f32 %v735, 1e-05
        %v801 = vadd.f32 %v736, 1e-05
        %v802 = vadd.f32 %v737, 1e-05
        %v803 = vadd.f32 %v738, 1e-05
        %v804 = vadd.f32 %v739, 1e-05
        %v805 = vadd.f32 %v740, 1e-05
        %v806 = vadd.f32 %v741, 1e-05
        %v807 = vadd.f32 %v742, 1e-05
        %v808 = vadd.f32 %v743, 1e-05
        %v809 = vadd.f32 %v744, 1e-05
        %v810 = vadd.f32 %v745, 1e-05
        %v811 = vadd.f32 %v746, 1e-05
        %v812 = vadd.f32 %v747, 1e-05
        %v813 = vadd.f32 %v748, 1e-05
        %v814 = vadd.f32 %v749, 1e-05
        %v815 = vadd.f32 %v750, 1e-05
        %v816 = vadd.f32 %v751, 1e-05
        %v817 = vadd.f32 %v752, 1e-05
        %v818 = vadd.f32 %v753, 1e-05
        %v819 = vadd.f32 %v754, 1e-05
        %v820 = vadd.f32 %v755, 1e-05
        %v821 = vadd.f32 %v756, 1e-05
        %v822 = vadd.f32 %v757, 1e-05
        %v823 = vadd.f32 %v758, 1e-05
        %v824 = vadd.f32 %v759, 1e-05
        %v825 = vadd.f32 %v760, 1e-05
        %v826 = vadd.f32 %v761, 1e-05
        %v827 = vadd.f32 %v762, 1e-05
        %v828 = vrsqrt.pop %v796
        %v829 = vrsqrt.pop %v797
        %v830 = vrsqrt.pop %v798
        %v831 = vrsqrt.pop %v799
        %v832 = vrsqrt.pop %v800
        %v833 = vrsqrt.pop %v801
        %v834 = vrsqrt.pop %v802
        %v835 = vrsqrt.pop %v803
        %v836 = vrsqrt.pop %v804
        %v837 = vrsqrt.pop %v805
        %v838 = vrsqrt.pop %v806
        %v839 = vrsqrt.pop %v807
        %v840 = vrsqrt.pop %v808
        %v841 = vrsqrt.pop %v809
        %v842 = vrsqrt.pop %v810
        %v843 = vrsqrt.pop %v811
        %v844 = vrsqrt.pop %v812
        %v845 = vrsqrt.pop %v813
        %v846 = vrsqrt.pop %v814
        %v847 = vrsqrt.pop %v815
        %v848 = vrsqrt.pop %v816
        %v849 = vrsqrt.pop %v817
        %v850 = vrsqrt.pop %v818
        %v851 = vrsqrt.pop %v819
        %v852 = vrsqrt.pop %v820
        %v853 = vrsqrt.pop %v821
        %v854 = vrsqrt.pop %v822
        %v855 = vrsqrt.pop %v823
        %v856 = vrsqrt.pop %v824
        %v857 = vrsqrt.pop %v825
        %v858 = vrsqrt.pop %v826
        %v859 = vrsqrt.pop %v827
        %v860 = vmul.f32 %v764, %v828
        %v861 = vmul.f32 %v765, %v829
        %v862 = vmul.f32 %v766, %v830
        %v863 = vmul.f32 %v767, %v831
        %v864 = vmul.f32 %v768, %v832
        %v865 = vmul.f32 %v769, %v833
        %v866 = vmul.f32 %v770, %v834
        %v867 = vmul.f32 %v771, %v835
        %v868 = vmul.f32 %v772, %v836
        %v869 = vmul.f32 %v773, %v837
        %v870 = vmul.f32 %v774, %v838
        %v871 = vmul.f32 %v775, %v839
        %v872 = vmul.f32 %v776, %v840
        %v873 = vmul.f32 %v777, %v841
        %v874 = vmul.f32 %v778, %v842
        %v875 = vmul.f32 %v779, %v843
        %v876 = vmul.f32 %v780, %v844
        %v877 = vmul.f32 %v781, %v845
        %v878 = vmul.f32 %v782, %v846
        %v879 = vmul.f32 %v783, %v847
        %v880 = vmul.f32 %v784, %v848
        %v881 = vmul.f32 %v785, %v849
        %v882 = vmul.f32 %v786, %v850
        %v883 = vmul.f32 %v787, %v851
        %v884 = vmul.f32 %v788, %v852
        %v885 = vmul.f32 %v789, %v853
        %v886 = vmul.f32 %v790, %v854
        %v887 = vmul.f32 %v791, %v855
        %v888 = vmul.f32 %v792, %v856
        %v889 = vmul.f32 %v793, %v857
        %v890 = vmul.f32 %v794, %v858
        %v891 = vmul.f32 %v795, %v859
        %v892 = vlaneseq
        %v893 = vshrl.u32 %v892, 7
        %v894 = vsub.s32 0, %v893
        %v895 = vrot.slane %v763, %v894
        %v896 = vmul.f32 %v860, %v895
        %v897 = vmul.f32 %v861, %v895
        %v898 = vmul.f32 %v862, %v895
        %v899 = vmul.f32 %v863, %v895
        %v900 = vmul.f32 %v864, %v895
        %v901 = vmul.f32 %v865, %v895
        %v902 = vmul.f32 %v866, %v895
        %v903 = vmul.f32 %v867, %v895
        %v904 = vmul.f32 %v868, %v895
        %v905 = vmul.f32 %v869, %v895
        %v906 = vmul.f32 %v870, %v895
        %v907 = vmul.f32 %v871, %v895
        %v908 = vmul.f32 %v872, %v895
        %v909 = vmul.f32 %v873, %v895
        %v910 = vmul.f32 %v874, %v895
        %v911 = vmul.f32 %v875, %v895
        %v912 = vmul.f32 %v876, %v895
        %v913 = vmul.f32 %v877, %v895
        %v914 = vmul.f32 %v878, %v895
        %v915 = vmul.f32 %v879, %v895
        %v916 = vmul.f32 %v880, %v895
        %v917 = vmul.f32 %v881, %v895
        %v918 = vmul.f32 %v882, %v895
        %v919 = vmul.f32 %v883, %v895
        %v920 = vmul.f32 %v884, %v895
        %v921 = vmul.f32 %v885, %v895
        %v922 = vmul.f32 %v886, %v895
        %v923 = vmul.f32 %v887, %v895
        %v924 = vmul.f32 %v888, %v895
        %v925 = vmul.f32 %v889, %v895
        %v926 = vmul.f32 %v890, %v895
        %v927 = vmul.f32 %v891, %v895
        %v928 = vlaneseq
        %v929 = vshrl.u32 %v928, 7
        %v930 = vsub.s32 1, %v929
        %v931 = vrot.slane %v763, %v930
        %v932 = vadd.f32 %v896, %v931
        %v933 = vadd.f32 %v897, %v931
        %v934 = vadd.f32 %v898, %v931
        %v935 = vadd.f32 %v899, %v931
        %v936 = vadd.f32 %v900, %v931
        %v937 = vadd.f32 %v901, %v931
        %v938 = vadd.f32 %v902, %v931
        %v939 = vadd.f32 %v903, %v931
        %v940 = vadd.f32 %v904, %v931
        %v941 = vadd.f32 %v905, %v931
        %v942 = vadd.f32 %v906, %v931
        %v943 = vadd.f32 %v907, %v931
        %v944 = vadd.f32 %v908, %v931
        %v945 = vadd.f32 %v909, %v931
        %v946 = vadd.f32 %v910, %v931
        %v947 = vadd.f32 %v911, %v931
        %v948 = vadd.f32 %v912, %v931
        %v949 = vadd.f32 %v913, %v931
        %v950 = vadd.f32 %v914, %v931
        %v951 = vadd.f32 %v915, %v931
        %v952 = vadd.f32 %v916, %v931
        %v953 = vadd.f32 %v917, %v931
        %v954 = vadd.f32 %v918, %v931
        %v955 = vadd.f32 %v919, %v931
        %v956 = vadd.f32 %v920, %v931
        %v957 = vadd.f32 %v921, %v931
        %v958 = vadd.f32 %v922, %v931
        %v959 = vadd.f32 %v923, %v931
        %v960 = vadd.f32 %v924, %v931
        %v961 = vadd.f32 %v925, %v931
        %v962 = vadd.f32 %v926, %v931
        %v963 = vadd.f32 %v927, %v931
        %v964 = vmax.f32 %v932, 0.0
        %v965 = vmax.f32 %v933, 0.0
        %v966 = vmax.f32 %v934, 0.0
        %v967 = vmax.f32 %v935, 0.0
        %v968 = vmax.f32 %v936, 0.0
        %v969 = vmax.f32 %v937, 0.0
        %v970 = vmax.f32 %v938, 0.0
        %v971 = vmax.f32 %v939, 0.0
        %v972 = vmax.f32 %v940, 0.0
        %v973 = vmax.f32 %v941, 0.0
        %v974 = vmax.f32 %v942, 0.0
        %v975 = vmax.f32 %v943, 0.0
        %v976 = vmax.f32 %v944, 0.0
        %v977 = vmax.f32 %v945, 0.0
        %v978 = vmax.f32 %v946, 0.0
        %v979 = vmax.f32 %v947, 0.0
        %v980 = vmax.f32 %v948, 0.0
        %v981 = vmax.f32 %v949, 0.0
        %v982 = vmax.f32 %v950, 0.0
        %v983 = vmax.f32 %v951, 0.0
        %v984 = vmax.f32 %v952, 0.0
        %v985 = vmax.f32 %v953, 0.0
        %v986 = vmax.f32 %v954, 0.0
        %v987 = vmax.f32 %v955, 0.0
        %v988 = vmax.f32 %v956, 0.0
        %v989 = vmax.f32 %v957, 0.0
        %v990 = vmax.f32 %v958, 0.0
        %v991 = vmax.f32 %v959, 0.0
        %v992 = vmax.f32 %v960, 0.0
        %v993 = vmax.f32 %v961, 0.0
        %v994 = vmax.f32 %v962, 0.0
        %v995 = vmax.f32 %v963, 0.0
        %v996 = vpack.c.bf16 %v965, %v964
        %v997 = vpack.c.bf16 %v967, %v966
        %v998 = vpack.c.bf16 %v969, %v968
        %v999 = vpack.c.bf16 %v971, %v970
        %v1000 = vpack.c.bf16 %v973, %v972
        %v1001 = vpack.c.bf16 %v975, %v974
        %v1002 = vpack.c.bf16 %v977, %v976
        %v1003 = vpack.c.bf16 %v979, %v978
        %v1004 = vpack.c.bf16 %v981, %v980
        %v1005 = vpack.c.bf16 %v983, %v982
        %v1006 = vpack.c.bf16 %v985, %v984
        %v1007 = vpack.c.bf16 %v987, %v986
        %v1008 = vpack.c.bf16 %v989, %v988
        %v1009 = vpack.c.bf16 %v991, %v990
        %v1010 = vpack.c.bf16 %v993, %v992
        %v1011 = vpack.c.bf16 %v995, %v994
        %v1012 = vld [vmem:[%s293] sm:$0xf]
        %v1013 = vld [vmem:[%s293 + $0x4] sm:$0xf]
        %v1014 = vld [vmem:[%s293 + $0x8] sm:$0xf]
        %v1015 = vld [vmem:[%s293 + $0xc] sm:$0xf]
        %v1016 = vld [vmem:[%s293 + $0x10] sm:$0xf]
        %v1017 = vld [vmem:[%s293 + $0x14] sm:$0xf]
        %v1018 = vld [vmem:[%s293 + $0x18] sm:$0xf]
        %v1019 = vld [vmem:[%s293 + $0x1c] sm:$0xf]
        %v1020 = vld [vmem:[%s293 + $0x20] sm:$0xf]
        %v1021 = vld [vmem:[%s293 + $0x24] sm:$0xf]
        %v1022 = vld [vmem:[%s293 + $0x28] sm:$0xf]
        %v1023 = vld [vmem:[%s293 + $0x2c] sm:$0xf]
        %v1024 = vld [vmem:[%s293 + $0x30] sm:$0xf]
        %v1025 = vld [vmem:[%s293 + $0x34] sm:$0xf]
        %v1026 = vld [vmem:[%s293 + $0x38] sm:$0xf]
        %v1027 = vld [vmem:[%s293 + $0x3c] sm:$0xf]
        %v1044 = vunpack.c.l.b16 %v1012
        %v1045 = vunpack.c.l.b16 %v1013
        %v1046 = vunpack.c.l.b16 %v1014
        %v1047 = vunpack.c.l.b16 %v1015
        %v1048 = vunpack.c.l.b16 %v1016
        %v1049 = vunpack.c.l.b16 %v1017
        %v1050 = vunpack.c.l.b16 %v1018
        %v1051 = vunpack.c.l.b16 %v1019
        %v1052 = vunpack.c.l.b16 %v1020
        %v1053 = vunpack.c.l.b16 %v1021
        %v1054 = vunpack.c.l.b16 %v1022
        %v1055 = vunpack.c.l.b16 %v1023
        %v1056 = vunpack.c.l.b16 %v1024
        %v1057 = vunpack.c.l.b16 %v1025
        %v1058 = vunpack.c.l.b16 %v1026
        %v1059 = vunpack.c.l.b16 %v1027
        %v1060 = vpack.c.b16 %v1045, %v1044
        %v1061 = vpack.c.b16 %v1047, %v1046
        %v1062 = vpack.c.b16 %v1049, %v1048
        %v1063 = vpack.c.b16 %v1051, %v1050
        %v1064 = vpack.c.b16 %v1053, %v1052
        %v1065 = vpack.c.b16 %v1055, %v1054
        %v1066 = vpack.c.b16 %v1057, %v1056
        %v1067 = vpack.c.b16 %v1059, %v1058
        %1076 = vmatprep.subr.bf16.mxu0 0
        %1077 = vmatpush1.bf16.msra.mxu0 %v1067
        %1078 = vmatprep.subr.bf16.mxu0 0
        %1079 = vmatpush1.bf16.msra.mxu0 %v1066
        %1080 = vmatprep.subr.bf16.mxu0 0
        %1081 = vmatpush1.bf16.msra.mxu0 %v1065
        %1082 = vmatprep.subr.bf16.mxu0 0
        %1083 = vmatpush1.bf16.msra.mxu0 %v1064
        %1084 = vmatprep.subr.bf16.mxu0 0
        %1085 = vmatpush1.bf16.msra.mxu0 %v1063
        %1086 = vmatprep.subr.bf16.mxu0 0
        %1087 = vmatpush1.bf16.msra.mxu0 %v1062
        %1088 = vmatprep.subr.bf16.mxu0 0
        %1089 = vmatpush1.bf16.msra.mxu0 %v1061
        %1090 = vmatprep.subr.bf16.mxu0 0
        %1091 = vmatpush1.bf16.msra.mxu0 %v1060
        %1092 = vmatprep.subr.bf16.mxu0 0
        %1093 = vmatpush2.bf16.msra.mxu0 0
        %1094 = vmatprep.subr.bf16.mxu0 0
        %1095 = vmatpush2.bf16.msra.mxu0 0
        %1096 = vmatprep.subr.bf16.mxu0 0
        %1097 = vmatpush2.bf16.msra.mxu0 0
        %1098 = vmatprep.subr.bf16.mxu0 0
        %1099 = vmatpush2.bf16.msra.mxu0 0
        %1100 = vmatprep.subr.bf16.mxu0 0
        %1101 = vmatpush2.bf16.msra.mxu0 0
        %1102 = vmatprep.subr.bf16.mxu0 0
        %1103 = vmatpush2.bf16.msra.mxu0 0
        %1104 = vmatprep.subr.bf16.mxu0 0
        %1105 = vmatpush2.bf16.msra.mxu0 0
        %1106 = vmatprep.subr.bf16.mxu0 0
        %1107 = vmatpush2.bf16.msra.mxu0 0
        %1108 = vmatprep.mubr.bf16.mxu0 0
        %1109 = vmatmul.mubr.bf16.gmra.mxu0 %v996
        %v1110 = vpop.f32.mrf.mxu0
        %v1111 = vadd.f32 0.0, %v1110
        %v1112 = vpop.f32.mrf.mxu0
        %v1113 = vpop.f32.mrf.mxu0
        %v1114 = vadd.f32 0.0, %v1113
        %v1115 = vpop.f32.mrf.mxu0
        %1116 = vmatprep.mubr.bf16.mxu0 0
        %1117 = vmatmul.mubr.bf16.gmra.mxu0 %v997
        %v1118 = vpop.f32.mrf.mxu0
        %v1119 = vadd.f32 0.0, %v1118
        %v1120 = vpop.f32.mrf.mxu0
        %v1121 = vpop.f32.mrf.mxu0
        %v1122 = vadd.f32 0.0, %v1121
        %v1123 = vpop.f32.mrf.mxu0
        %1124 = vmatprep.mubr.bf16.mxu0 0
        %1125 = vmatmul.mubr.bf16.gmra.mxu0 %v998
        %v1126 = vpop.f32.mrf.mxu0
        %v1127 = vadd.f32 0.0, %v1126
        %v1128 = vpop.f32.mrf.mxu0
        %v1129 = vpop.f32.mrf.mxu0
        %v1130 = vadd.f32 0.0, %v1129
        %v1131 = vpop.f32.mrf.mxu0
        %1132 = vmatprep.mubr.bf16.mxu0 0
        %1133 = vmatmul.mubr.bf16.gmra.mxu0 %v999
        %v1134 = vpop.f32.mrf.mxu0
        %v1135 = vadd.f32 0.0, %v1134
        %v1136 = vpop.f32.mrf.mxu0
        %v1137 = vpop.f32.mrf.mxu0
        %v1138 = vadd.f32 0.0, %v1137
        %v1139 = vpop.f32.mrf.mxu0
        %1140 = vmatprep.mubr.bf16.mxu0 0
        %1141 = vmatmul.mubr.bf16.gmra.mxu0 %v1000
        %v1142 = vpop.f32.mrf.mxu0
        %v1143 = vadd.f32 0.0, %v1142
        %v1144 = vpop.f32.mrf.mxu0
        %v1145 = vpop.f32.mrf.mxu0
        %v1146 = vadd.f32 0.0, %v1145
        %v1147 = vpop.f32.mrf.mxu0
        %1148 = vmatprep.mubr.bf16.mxu0 0
        %1149 = vmatmul.mubr.bf16.gmra.mxu0 %v1001
        %v1150 = vpop.f32.mrf.mxu0
        %v1151 = vadd.f32 0.0, %v1150
        %v1152 = vpop.f32.mrf.mxu0
        %v1153 = vpop.f32.mrf.mxu0
        %v1154 = vadd.f32 0.0, %v1153
        %v1155 = vpop.f32.mrf.mxu0
        %1156 = vmatprep.mubr.bf16.mxu0 0
        %1157 = vmatmul.mubr.bf16.gmra.mxu0 %v1002
        %v1158 = vpop.f32.mrf.mxu0
        %v1159 = vadd.f32 0.0, %v1158
        %v1160 = vpop.f32.mrf.mxu0
        %v1161 = vpop.f32.mrf.mxu0
        %v1162 = vadd.f32 0.0, %v1161
        %v1163 = vpop.f32.mrf.mxu0
        %1164 = vmatprep.mubr.bf16.mxu0 0
        %1165 = vmatmul.mubr.bf16.gmra.mxu0 %v1003
        %v1166 = vpop.f32.mrf.mxu0
        %v1167 = vadd.f32 0.0, %v1166
        %v1168 = vpop.f32.mrf.mxu0
        %v1169 = vpop.f32.mrf.mxu0
        %v1170 = vadd.f32 0.0, %v1169
        %v1171 = vpop.f32.mrf.mxu0
        %1172 = vmatprep.mubr.bf16.mxu0 0
        %1173 = vmatmul.mubr.bf16.gmra.mxu0 %v1004
        %v1174 = vpop.f32.mrf.mxu0
        %v1175 = vadd.f32 0.0, %v1174
        %v1176 = vpop.f32.mrf.mxu0
        %v1177 = vpop.f32.mrf.mxu0
        %v1178 = vadd.f32 0.0, %v1177
        %v1179 = vpop.f32.mrf.mxu0
        %1180 = vmatprep.mubr.bf16.mxu0 0
        %1181 = vmatmul.mubr.bf16.gmra.mxu0 %v1005
        %v1182 = vpop.f32.mrf.mxu0
        %v1183 = vadd.f32 0.0, %v1182
        %v1184 = vpop.f32.mrf.mxu0
        %v1185 = vpop.f32.mrf.mxu0
        %v1186 = vadd.f32 0.0, %v1185
        %v1187 = vpop.f32.mrf.mxu0
        %1188 = vmatprep.mubr.bf16.mxu0 0
        %1189 = vmatmul.mubr.bf16.gmra.mxu0 %v1006
        %v1190 = vpop.f32.mrf.mxu0
        %v1191 = vadd.f32 0.0, %v1190
        %v1192 = vpop.f32.mrf.mxu0
        %v1193 = vpop.f32.mrf.mxu0
        %v1194 = vadd.f32 0.0, %v1193
        %v1195 = vpop.f32.mrf.mxu0
        %1196 = vmatprep.mubr.bf16.mxu0 0
        %1197 = vmatmul.mubr.bf16.gmra.mxu0 %v1007
        %v1198 = vpop.f32.mrf.mxu0
        %v1199 = vadd.f32 0.0, %v1198
        %v1200 = vpop.f32.mrf.mxu0
        %v1201 = vpop.f32.mrf.mxu0
        %v1202 = vadd.f32 0.0, %v1201
        %v1203 = vpop.f32.mrf.mxu0
        %1204 = vmatprep.mubr.bf16.mxu0 0
        %1205 = vmatmul.mubr.bf16.gmra.mxu0 %v1008
        %v1206 = vpop.f32.mrf.mxu0
        %v1207 = vadd.f32 0.0, %v1206
        %v1208 = vpop.f32.mrf.mxu0
        %v1209 = vpop.f32.mrf.mxu0
        %v1210 = vadd.f32 0.0, %v1209
        %v1211 = vpop.f32.mrf.mxu0
        %1212 = vmatprep.mubr.bf16.mxu0 0
        %1213 = vmatmul.mubr.bf16.gmra.mxu0 %v1009
        %v1214 = vpop.f32.mrf.mxu0
        %v1215 = vadd.f32 0.0, %v1214
        %v1216 = vpop.f32.mrf.mxu0
        %v1217 = vpop.f32.mrf.mxu0
        %v1218 = vadd.f32 0.0, %v1217
        %v1219 = vpop.f32.mrf.mxu0
        %1220 = vmatprep.mubr.bf16.mxu0 0
        %1221 = vmatmul.mubr.bf16.gmra.mxu0 %v1010
        %v1222 = vpop.f32.mrf.mxu0
        %v1223 = vadd.f32 0.0, %v1222
        %v1224 = vpop.f32.mrf.mxu0
        %v1225 = vpop.f32.mrf.mxu0
        %v1226 = vadd.f32 0.0, %v1225
        %v1227 = vpop.f32.mrf.mxu0
        %1228 = vmatprep.mubr.bf16.mxu0 0
        %1229 = vmatmul.mubr.bf16.gmra.mxu0 %v1011
        %v1230 = vpop.f32.mrf.mxu0
        %v1231 = vadd.f32 0.0, %v1230
        %v1232 = vpop.f32.mrf.mxu0
        %v1233 = vpop.f32.mrf.mxu0
        %v1234 = vadd.f32 0.0, %v1233
        %v1235 = vpop.f32.mrf.mxu0
        %1236 = vdwg.mxu0
        %v1237 = vld [vmem:[%s284] sm:$0xff]
        %v1238 = vld [vmem:[%s284 + $0x8] sm:$0xff]
        %v1239 = vld [vmem:[%s284 + $0x10] sm:$0xff]
        %v1240 = vld [vmem:[%s284 + $0x18] sm:$0xff]
        %v1241 = vld [vmem:[%s284 + $0x20] sm:$0xff]
        %v1242 = vld [vmem:[%s284 + $0x28] sm:$0xff]
        %v1243 = vld [vmem:[%s284 + $0x30] sm:$0xff]
        %v1244 = vld [vmem:[%s284 + $0x38] sm:$0xff]
        %v1245 = vld [vmem:[%s284 + $0x40] sm:$0xff]
        %v1246 = vld [vmem:[%s284 + $0x48] sm:$0xff]
        %v1247 = vld [vmem:[%s284 + $0x50] sm:$0xff]
        %v1248 = vld [vmem:[%s284 + $0x58] sm:$0xff]
        %v1249 = vld [vmem:[%s284 + $0x60] sm:$0xff]
        %v1250 = vld [vmem:[%s284 + $0x68] sm:$0xff]
        %v1251 = vld [vmem:[%s284 + $0x70] sm:$0xff]
        %v1252 = vld [vmem:[%s284 + $0x78] sm:$0xff]
        %v1253 = vld [vmem:[%s284 + $0x80] sm:$0xff]
        %v1254 = vld [vmem:[%s284 + $0x88] sm:$0xff]
        %v1255 = vld [vmem:[%s284 + $0x90] sm:$0xff]
        %v1256 = vld [vmem:[%s284 + $0x98] sm:$0xff]
        %v1257 = vld [vmem:[%s284 + $0xa0] sm:$0xff]
        %v1258 = vld [vmem:[%s284 + $0xa8] sm:$0xff]
        %v1259 = vld [vmem:[%s284 + $0xb0] sm:$0xff]
        %v1260 = vld [vmem:[%s284 + $0xb8] sm:$0xff]
        %v1261 = vld [vmem:[%s284 + $0xc0] sm:$0xff]
        %v1262 = vld [vmem:[%s284 + $0xc8] sm:$0xff]
        %v1263 = vld [vmem:[%s284 + $0xd0] sm:$0xff]
        %v1264 = vld [vmem:[%s284 + $0xd8] sm:$0xff]
        %v1265 = vld [vmem:[%s284 + $0xe0] sm:$0xff]
        %v1266 = vld [vmem:[%s284 + $0xe8] sm:$0xff]
        %v1267 = vld [vmem:[%s284 + $0xf0] sm:$0xff]
        %v1268 = vld [vmem:[%s284 + $0xf8] sm:$0xff]
        %v1269 = vpack.c.bf16 %v1114, %v1111
        %v1270 = vpack.c.bf16 %v1122, %v1119
        %v1271 = vpack.c.bf16 %v1130, %v1127
        %v1272 = vpack.c.bf16 %v1138, %v1135
        %v1273 = vpack.c.bf16 %v1146, %v1143
        %v1274 = vpack.c.bf16 %v1154, %v1151
        %v1275 = vpack.c.bf16 %v1162, %v1159
        %v1276 = vpack.c.bf16 %v1170, %v1167
        %v1277 = vpack.c.bf16 %v1178, %v1175
        %v1278 = vpack.c.bf16 %v1186, %v1183
        %v1279 = vpack.c.bf16 %v1194, %v1191
        %v1280 = vpack.c.bf16 %v1202, %v1199
        %v1281 = vpack.c.bf16 %v1210, %v1207
        %v1282 = vpack.c.bf16 %v1218, %v1215
        %v1283 = vpack.c.bf16 %v1226, %v1223
        %v1284 = vpack.c.bf16 %v1234, %v1231
        %v1317 = vunpack.c.l.b16 %v1237
        %v1318 = vunpack.c.h.b16 %v1237
        %v1319 = vunpack.c.l.b16 %v1238
        %v1320 = vunpack.c.h.b16 %v1238
        %v1321 = vunpack.c.l.b16 %v1239
        %v1322 = vunpack.c.h.b16 %v1239
        %v1323 = vunpack.c.l.b16 %v1240
        %v1324 = vunpack.c.h.b16 %v1240
        %v1325 = vunpack.c.l.b16 %v1241
        %v1326 = vunpack.c.h.b16 %v1241
        %v1327 = vunpack.c.l.b16 %v1242
        %v1328 = vunpack.c.h.b16 %v1242
        %v1329 = vunpack.c.l.b16 %v1243
        %v1330 = vunpack.c.h.b16 %v1243
        %v1331 = vunpack.c.l.b16 %v1244
        %v1332 = vunpack.c.h.b16 %v1244
        %v1333 = vunpack.c.l.b16 %v1245
        %v1334 = vunpack.c.h.b16 %v1245
        %v1335 = vunpack.c.l.b16 %v1246
        %v1336 = vunpack.c.h.b16 %v1246
        %v1337 = vunpack.c.l.b16 %v1247
        %v1338 = vunpack.c.h.b16 %v1247
        %v1339 = vunpack.c.l.b16 %v1248
        %v1340 = vunpack.c.h.b16 %v1248
        %v1341 = vunpack.c.l.b16 %v1249
        %v1342 = vunpack.c.h.b16 %v1249
        %v1343 = vunpack.c.l.b16 %v1250
        %v1344 = vunpack.c.h.b16 %v1250
        %v1345 = vunpack.c.l.b16 %v1251
        %v1346 = vunpack.c.h.b16 %v1251
        %v1347 = vunpack.c.l.b16 %v1252
        %v1348 = vunpack.c.h.b16 %v1252
        %v1349 = vunpack.c.l.b16 %v1253
        %v1350 = vunpack.c.h.b16 %v1253
        %v1351 = vunpack.c.l.b16 %v1254
        %v1352 = vunpack.c.h.b16 %v1254
        %v1353 = vunpack.c.l.b16 %v1255
        %v1354 = vunpack.c.h.b16 %v1255
        %v1355 = vunpack.c.l.b16 %v1256
        %v1356 = vunpack.c.h.b16 %v1256
        %v1357 = vunpack.c.l.b16 %v1257
        %v1358 = vunpack.c.h.b16 %v1257
        %v1359 = vunpack.c.l.b16 %v1258
        %v1360 = vunpack.c.h.b16 %v1258
        %v1361 = vunpack.c.l.b16 %v1259
        %v1362 = vunpack.c.h.b16 %v1259
        %v1363 = vunpack.c.l.b16 %v1260
        %v1364 = vunpack.c.h.b16 %v1260
        %v1365 = vunpack.c.l.b16 %v1261
        %v1366 = vunpack.c.h.b16 %v1261
        %v1367 = vunpack.c.l.b16 %v1262
        %v1368 = vunpack.c.h.b16 %v1262
        %v1369 = vunpack.c.l.b16 %v1263
        %v1370 = vunpack.c.h.b16 %v1263
        %v1371 = vunpack.c.l.b16 %v1264
        %v1372 = vunpack.c.h.b16 %v1264
        %v1373 = vunpack.c.l.b16 %v1265
        %v1374 = vunpack.c.h.b16 %v1265
        %v1375 = vunpack.c.l.b16 %v1266
        %v1376 = vunpack.c.h.b16 %v1266
        %v1377 = vunpack.c.l.b16 %v1267
        %v1378 = vunpack.c.h.b16 %v1267
        %v1379 = vunpack.c.l.b16 %v1268
        %v1380 = vunpack.c.h.b16 %v1268
        %v1381 = vpack.c.b16 %v1319, %v1317
        %v1382 = vpack.c.b16 %v1320, %v1318
        %v1383 = vpack.c.b16 %v1323, %v1321
        %v1384 = vpack.c.b16 %v1324, %v1322
        %v1385 = vpack.c.b16 %v1327, %v1325
        %v1386 = vpack.c.b16 %v1328, %v1326
        %v1387 = vpack.c.b16 %v1331, %v1329
        %v1388 = vpack.c.b16 %v1332, %v1330
        %v1389 = vpack.c.b16 %v1335, %v1333
        %v1390 = vpack.c.b16 %v1336, %v1334
        %v1391 = vpack.c.b16 %v1339, %v1337
        %v1392 = vpack.c.b16 %v1340, %v1338
        %v1393 = vpack.c.b16 %v1343, %v1341
        %v1394 = vpack.c.b16 %v1344, %v1342
        %v1395 = vpack.c.b16 %v1347, %v1345
        %v1396 = vpack.c.b16 %v1348, %v1346
        %v1397 = vpack.c.b16 %v1351, %v1349
        %v1398 = vpack.c.b16 %v1352, %v1350
        %v1399 = vpack.c.b16 %v1355, %v1353
        %v1400 = vpack.c.b16 %v1356, %v1354
        %v1401 = vpack.c.b16 %v1359, %v1357
        %v1402 = vpack.c.b16 %v1360, %v1358
        %v1403 = vpack.c.b16 %v1363, %v1361
        %v1404 = vpack.c.b16 %v1364, %v1362
        %v1405 = vpack.c.b16 %v1367, %v1365
        %v1406 = vpack.c.b16 %v1368, %v1366
        %v1407 = vpack.c.b16 %v1371, %v1369
        %v1408 = vpack.c.b16 %v1372, %v1370
        %v1409 = vpack.c.b16 %v1375, %v1373
        %v1410 = vpack.c.b16 %v1376, %v1374
        %v1411 = vpack.c.b16 %v1379, %v1377
        %v1412 = vpack.c.b16 %v1380, %v1378
        %1445 = vmatprep.subr.bf16.mxu0 0
        %1446 = vmatpush1.bf16.msra.mxu0 %v1276
        %1447 = vmatprep.subr.bf16.mxu0 0
        %1448 = vmatpush1.bf16.msra.mxu0 %v1275
        %1449 = vmatprep.subr.bf16.mxu0 0
        %1450 = vmatpush1.bf16.msra.mxu0 %v1274
        %1451 = vmatprep.subr.bf16.mxu0 0
        %1452 = vmatpush1.bf16.msra.mxu0 %v1273
        %1453 = vmatprep.subr.bf16.mxu0 0
        %1454 = vmatpush1.bf16.msra.mxu0 %v1272
        %1455 = vmatprep.subr.bf16.mxu0 0
        %1456 = vmatpush1.bf16.msra.mxu0 %v1271
        %1457 = vmatprep.subr.bf16.mxu0 0
        %1458 = vmatpush1.bf16.msra.mxu0 %v1270
        %1459 = vmatprep.subr.bf16.mxu0 0
        %1460 = vmatpush1.bf16.msra.mxu0 %v1269
        %1461 = vmatprep.subr.bf16.mxu0 0
        %1462 = vmatpush2.bf16.msra.mxu0 %v1284
        %1463 = vmatprep.subr.bf16.mxu0 0
        %1464 = vmatpush2.bf16.msra.mxu0 %v1283
        %1465 = vmatprep.subr.bf16.mxu0 0
        %1466 = vmatpush2.bf16.msra.mxu0 %v1282
        %1467 = vmatprep.subr.bf16.mxu0 0
        %1468 = vmatpush2.bf16.msra.mxu0 %v1281
        %1469 = vmatprep.subr.bf16.mxu0 0
        %1470 = vmatpush2.bf16.msra.mxu0 %v1280
        %1471 = vmatprep.subr.bf16.mxu0 0
        %1472 = vmatpush2.bf16.msra.mxu0 %v1279
        %1473 = vmatprep.subr.bf16.mxu0 0
        %1474 = vmatpush2.bf16.msra.mxu0 %v1278
        %1475 = vmatprep.subr.bf16.mxu0 0
        %1476 = vmatpush2.bf16.msra.mxu0 %v1277
        %1477 = vmatprep.mubr.bf16.mxu0 %v1382
        %1478 = vmatmul.mubr.bf16.gmra.mxu0 %v1381
        %v1479 = vpop.f32.mrf.mxu0
        %v1480 = vadd.f32 0.0, %v1479
        %v1481 = vpop.f32.mrf.mxu0
        %v1482 = vpop.f32.mrf.mxu0
        %v1483 = vadd.f32 0.0, %v1482
        %v1484 = vpop.f32.mrf.mxu0
        %1485 = vmatprep.mubr.bf16.mxu0 %v1384
        %1486 = vmatmul.mubr.bf16.gmra.mxu0 %v1383
        %v1487 = vpop.f32.mrf.mxu0
        %v1488 = vadd.f32 0.0, %v1487
        %v1489 = vpop.f32.mrf.mxu0
        %v1490 = vpop.f32.mrf.mxu0
        %v1491 = vadd.f32 0.0, %v1490
        %v1492 = vpop.f32.mrf.mxu0
        %1493 = vmatprep.mubr.bf16.mxu0 %v1386
        %1494 = vmatmul.mubr.bf16.gmra.mxu0 %v1385
        %v1495 = vpop.f32.mrf.mxu0
        %v1496 = vadd.f32 0.0, %v1495
        %v1497 = vpop.f32.mrf.mxu0
        %v1498 = vpop.f32.mrf.mxu0
        %v1499 = vadd.f32 0.0, %v1498
        %v1500 = vpop.f32.mrf.mxu0
        %1501 = vmatprep.mubr.bf16.mxu0 %v1388
        %1502 = vmatmul.mubr.bf16.gmra.mxu0 %v1387
        %v1503 = vpop.f32.mrf.mxu0
        %v1504 = vadd.f32 0.0, %v1503
        %v1505 = vpop.f32.mrf.mxu0
        %v1506 = vpop.f32.mrf.mxu0
        %v1507 = vadd.f32 0.0, %v1506
        %v1508 = vpop.f32.mrf.mxu0
        %1509 = vmatprep.mubr.bf16.mxu0 %v1390
        %1510 = vmatmul.mubr.bf16.gmra.mxu0 %v1389
        %v1511 = vpop.f32.mrf.mxu0
        %v1512 = vadd.f32 0.0, %v1511
        %v1513 = vpop.f32.mrf.mxu0
        %v1514 = vpop.f32.mrf.mxu0
        %v1515 = vadd.f32 0.0, %v1514
        %v1516 = vpop.f32.mrf.mxu0
        %1517 = vmatprep.mubr.bf16.mxu0 %v1392
        %1518 = vmatmul.mubr.bf16.gmra.mxu0 %v1391
        %v1519 = vpop.f32.mrf.mxu0
        %v1520 = vadd.f32 0.0, %v1519
        %v1521 = vpop.f32.mrf.mxu0
        %v1522 = vpop.f32.mrf.mxu0
        %v1523 = vadd.f32 0.0, %v1522
        %v1524 = vpop.f32.mrf.mxu0
        %1525 = vmatprep.mubr.bf16.mxu0 %v1394
        %1526 = vmatmul.mubr.bf16.gmra.mxu0 %v1393
        %v1527 = vpop.f32.mrf.mxu0
        %v1528 = vadd.f32 0.0, %v1527
        %v1529 = vpop.f32.mrf.mxu0
        %v1530 = vpop.f32.mrf.mxu0
        %v1531 = vadd.f32 0.0, %v1530
        %v1532 = vpop.f32.mrf.mxu0
        %1533 = vmatprep.mubr.bf16.mxu0 %v1396
        %1534 = vmatmul.mubr.bf16.gmra.mxu0 %v1395
        %v1535 = vpop.f32.mrf.mxu0
        %v1536 = vadd.f32 0.0, %v1535
        %v1537 = vpop.f32.mrf.mxu0
        %v1538 = vpop.f32.mrf.mxu0
        %v1539 = vadd.f32 0.0, %v1538
        %v1540 = vpop.f32.mrf.mxu0
        %1541 = vmatprep.mubr.bf16.mxu0 %v1398
        %1542 = vmatmul.mubr.bf16.gmra.mxu0 %v1397
        %v1543 = vpop.f32.mrf.mxu0
        %v1544 = vadd.f32 0.0, %v1543
        %v1545 = vpop.f32.mrf.mxu0
        %v1546 = vpop.f32.mrf.mxu0
        %v1547 = vadd.f32 0.0, %v1546
        %v1548 = vpop.f32.mrf.mxu0
        %1549 = vmatprep.mubr.bf16.mxu0 %v1400
        %1550 = vmatmul.mubr.bf16.gmra.mxu0 %v1399
        %v1551 = vpop.f32.mrf.mxu0
        %v1552 = vadd.f32 0.0, %v1551
        %v1553 = vpop.f32.mrf.mxu0
        %v1554 = vpop.f32.mrf.mxu0
        %v1555 = vadd.f32 0.0, %v1554
        %v1556 = vpop.f32.mrf.mxu0
        %1557 = vmatprep.mubr.bf16.mxu0 %v1402
        %1558 = vmatmul.mubr.bf16.gmra.mxu0 %v1401
        %v1559 = vpop.f32.mrf.mxu0
        %v1560 = vadd.f32 0.0, %v1559
        %v1561 = vpop.f32.mrf.mxu0
        %v1562 = vpop.f32.mrf.mxu0
        %v1563 = vadd.f32 0.0, %v1562
        %v1564 = vpop.f32.mrf.mxu0
        %1565 = vmatprep.mubr.bf16.mxu0 %v1404
        %1566 = vmatmul.mubr.bf16.gmra.mxu0 %v1403
        %v1567 = vpop.f32.mrf.mxu0
        %v1568 = vadd.f32 0.0, %v1567
        %v1569 = vpop.f32.mrf.mxu0
        %v1570 = vpop.f32.mrf.mxu0
        %v1571 = vadd.f32 0.0, %v1570
        %v1572 = vpop.f32.mrf.mxu0
        %1573 = vmatprep.mubr.bf16.mxu0 %v1406
        %1574 = vmatmul.mubr.bf16.gmra.mxu0 %v1405
        %v1575 = vpop.f32.mrf.mxu0
        %v1576 = vadd.f32 0.0, %v1575
        %v1577 = vpop.f32.mrf.mxu0
        %v1578 = vpop.f32.mrf.mxu0
        %v1579 = vadd.f32 0.0, %v1578
        %v1580 = vpop.f32.mrf.mxu0
        %1581 = vmatprep.mubr.bf16.mxu0 %v1408
        %1582 = vmatmul.mubr.bf16.gmra.mxu0 %v1407
        %v1583 = vpop.f32.mrf.mxu0
        %v1584 = vadd.f32 0.0, %v1583
        %v1585 = vpop.f32.mrf.mxu0
        %v1586 = vpop.f32.mrf.mxu0
        %v1587 = vadd.f32 0.0, %v1586
        %v1588 = vpop.f32.mrf.mxu0
        %1589 = vmatprep.mubr.bf16.mxu0 %v1410
        %1590 = vmatmul.mubr.bf16.gmra.mxu0 %v1409
        %v1591 = vpop.f32.mrf.mxu0
        %v1592 = vadd.f32 0.0, %v1591
        %v1593 = vpop.f32.mrf.mxu0
        %v1594 = vpop.f32.mrf.mxu0
        %v1595 = vadd.f32 0.0, %v1594
        %v1596 = vpop.f32.mrf.mxu0
        %1597 = vmatprep.mubr.bf16.mxu0 %v1412
        %1598 = vmatmul.mubr.bf16.gmra.mxu0 %v1411
        %v1599 = vpop.f32.mrf.mxu0
        %v1600 = vadd.f32 0.0, %v1599
        %v1601 = vpop.f32.mrf.mxu0
        %v1602 = vpop.f32.mrf.mxu0
        %v1603 = vadd.f32 0.0, %v1602
        %v1604 = vpop.f32.mrf.mxu0
        %1605 = vdwg.mxu0
        %v1606 = vadd.f32 %v411, %v1480
        %v1607 = vadd.f32 %v412, %v1483
        %v1608 = vadd.f32 %v413, %v1488
        %v1609 = vadd.f32 %v414, %v1491
        %v1610 = vadd.f32 %v415, %v1496
        %v1611 = vadd.f32 %v416, %v1499
        %v1612 = vadd.f32 %v417, %v1504
        %v1613 = vadd.f32 %v418, %v1507
        %v1614 = vadd.f32 %v419, %v1512
        %v1615 = vadd.f32 %v420, %v1515
        %v1616 = vadd.f32 %v421, %v1520
        %v1617 = vadd.f32 %v422, %v1523
        %v1618 = vadd.f32 %v423, %v1528
        %v1619 = vadd.f32 %v424, %v1531
        %v1620 = vadd.f32 %v425, %v1536
        %v1621 = vadd.f32 %v426, %v1539
        %v1622 = vadd.f32 %v427, %v1544
        %v1623 = vadd.f32 %v428, %v1547
        %v1624 = vadd.f32 %v429, %v1552
        %v1625 = vadd.f32 %v430, %v1555
        %v1626 = vadd.f32 %v431, %v1560
        %v1627 = vadd.f32 %v432, %v1563
        %v1628 = vadd.f32 %v433, %v1568
        %v1629 = vadd.f32 %v434, %v1571
        %v1630 = vadd.f32 %v435, %v1576
        %v1631 = vadd.f32 %v436, %v1579
        %v1632 = vadd.f32 %v437, %v1584
        %v1633 = vadd.f32 %v438, %v1587
        %v1634 = vadd.f32 %v439, %v1592
        %v1635 = vadd.f32 %v440, %v1595
        %v1636 = vadd.f32 %v441, %v1600
        %v1637 = vadd.f32 %v442, %v1603
        %v1638 = vlaneseq
        %v1639 = vshrl.u32 %v1638, 7
        %v1640 = vsub.s32 2, %v1639
        %v1641 = vrot.slane %v763, %v1640
        %v1642 = vadd.f32 %v1606, %v1641
        %v1643 = vadd.f32 %v1607, %v1641
        %v1644 = vadd.f32 %v1608, %v1641
        %v1645 = vadd.f32 %v1609, %v1641
        %v1646 = vadd.f32 %v1610, %v1641
        %v1647 = vadd.f32 %v1611, %v1641
        %v1648 = vadd.f32 %v1612, %v1641
        %v1649 = vadd.f32 %v1613, %v1641
        %v1650 = vadd.f32 %v1614, %v1641
        %v1651 = vadd.f32 %v1615, %v1641
        %v1652 = vadd.f32 %v1616, %v1641
        %v1653 = vadd.f32 %v1617, %v1641
        %v1654 = vadd.f32 %v1618, %v1641
        %v1655 = vadd.f32 %v1619, %v1641
        %v1656 = vadd.f32 %v1620, %v1641
        %v1657 = vadd.f32 %v1621, %v1641
        %v1658 = vadd.f32 %v1622, %v1641
        %v1659 = vadd.f32 %v1623, %v1641
        %v1660 = vadd.f32 %v1624, %v1641
        %v1661 = vadd.f32 %v1625, %v1641
        %v1662 = vadd.f32 %v1626, %v1641
        %v1663 = vadd.f32 %v1627, %v1641
        %v1664 = vadd.f32 %v1628, %v1641
        %v1665 = vadd.f32 %v1629, %v1641
        %v1666 = vadd.f32 %v1630, %v1641
        %v1667 = vadd.f32 %v1631, %v1641
        %v1668 = vadd.f32 %v1632, %v1641
        %v1669 = vadd.f32 %v1633, %v1641
        %v1670 = vadd.f32 %v1634, %v1641
        %v1671 = vadd.f32 %v1635, %v1641
        %v1672 = vadd.f32 %v1636, %v1641
        %v1673 = vadd.f32 %v1637, %v1641
        %1674 = vst [vmem:[%s341] sm:$0xff] %v1642
        %1675 = vst [vmem:[%s341 + $0x8] sm:$0xff] %v1643
        %1676 = vst [vmem:[%s341 + $0x10] sm:$0xff] %v1644
        %1677 = vst [vmem:[%s341 + $0x18] sm:$0xff] %v1645
        %1678 = vst [vmem:[%s341 + $0x20] sm:$0xff] %v1646
        %1679 = vst [vmem:[%s341 + $0x28] sm:$0xff] %v1647
        %1680 = vst [vmem:[%s341 + $0x30] sm:$0xff] %v1648
        %1681 = vst [vmem:[%s341 + $0x38] sm:$0xff] %v1649
        %1682 = vst [vmem:[%s341 + $0x40] sm:$0xff] %v1650
        %1683 = vst [vmem:[%s341 + $0x48] sm:$0xff] %v1651
        %1684 = vst [vmem:[%s341 + $0x50] sm:$0xff] %v1652
        %1685 = vst [vmem:[%s341 + $0x58] sm:$0xff] %v1653
        %1686 = vst [vmem:[%s341 + $0x60] sm:$0xff] %v1654
        %1687 = vst [vmem:[%s341 + $0x68] sm:$0xff] %v1655
        %1688 = vst [vmem:[%s341 + $0x70] sm:$0xff] %v1656
        %1689 = vst [vmem:[%s341 + $0x78] sm:$0xff] %v1657
        %1690 = vst [vmem:[%s341 + $0x80] sm:$0xff] %v1658
        %1691 = vst [vmem:[%s341 + $0x88] sm:$0xff] %v1659
        %1692 = vst [vmem:[%s341 + $0x90] sm:$0xff] %v1660
        %1693 = vst [vmem:[%s341 + $0x98] sm:$0xff] %v1661
        %1694 = vst [vmem:[%s341 + $0xa0] sm:$0xff] %v1662
        %1695 = vst [vmem:[%s341 + $0xa8] sm:$0xff] %v1663
        %1696 = vst [vmem:[%s341 + $0xb0] sm:$0xff] %v1664
        %1697 = vst [vmem:[%s341 + $0xb8] sm:$0xff] %v1665
        %1698 = vst [vmem:[%s341 + $0xc0] sm:$0xff] %v1666
        %1699 = vst [vmem:[%s341 + $0xc8] sm:$0xff] %v1667
        %1700 = vst [vmem:[%s341 + $0xd0] sm:$0xff] %v1668
        %1701 = vst [vmem:[%s341 + $0xd8] sm:$0xff] %v1669
        %1702 = vst [vmem:[%s341 + $0xe0] sm:$0xff] %v1670
        %1703 = vst [vmem:[%s341 + $0xe8] sm:$0xff] %v1671
        %1704 = vst [vmem:[%s341 + $0xf0] sm:$0xff] %v1672
        %1705 = vst [vmem:[%s341 + $0xf8] sm:$0xff] %v1673
        %s1706 = sand.u32 %s151, 1
        %s1707 = scalar_lea.sflag [#allocation4], %s1706
        %s1708 = sand.u32 %s151, 1
        %s1709 = smul.addr %s1708, 256
        %s1710 = scalar_lea.vmem [#allocation10], %s1709
        // Predicated region
        $region57: #{tpu_custom_call.1} parent=35 // pred_check
          %p1711 = pneg %p161
        $region58: #{tpu_custom_call.1} parent=35 // pred_check_branch
          %1713 = sbr.rel (%p1711) target = $region60
        $region59: #{tpu_custom_call.1} parent=35 // pred_region
          %s1715 = ssub.s32 4096, 4096
          %1716 = vsyncadd %s1707, %s1715
          %s1717 = smul.addr %s31, 32
          %s1718 = smul.addr %s1717, 128
          %s1719 = scalar_lea.hbm %s4, %s1718
          %s1720 = sshll.u32 %s1710, 4
          %s1721 = int_to_ptr.vmem [resolvable:$true] %s1720
          %1726 = dma.vmem_to_hbm [thread:$0]  %s1721, 4096, %s1719, %s1707, 128, 128, 8
        $region60: #{tpu_custom_call.1} parent=35 // pred_fallthru
          _
      $region36: #{tpu_custom_call.1} parent=5 // pred_fallthru
        _
      %p1727 = scmp.le.s32.totalorder 2, %s22
      // Predicated region
      $region61: #{tpu_custom_call.1} parent=5 // pred_check
        %p1728 = pneg %p1727
      $region62: #{tpu_custom_call.1} parent=5 // pred_check_branch
        %1730 = sbr.rel (%p1728) target = $region64
      $region63: #{tpu_custom_call.1} parent=5 // pred_region
        %s1731 = ssub.s32 %s22, 2
        // Predicated region
        $region65: #{tpu_custom_call.1} parent=63 // pred_check
          %p1732 = pneg %p167
        $region66: #{tpu_custom_call.1} parent=63 // pred_check_branch
          %1734 = sbr.rel (%p1732) target = $region68
        $region67: #{tpu_custom_call.1} parent=63 // pred_region
          %s1735 = sand.u32 %s152, 1
          %s1736 = scalar_lea.sflag [#allocation4], %s1735
          %s1737 = sand.u32 %s152, 1
          %s1738 = smul.addr %s1737, 256
          %s1739 = scalar_lea.vmem [#allocation10], %s1738
          %1740 = dma.done %s1736, 4096
        $region68: #{tpu_custom_call.1} parent=63 // pred_fallthru
          _
      $region64: #{tpu_custom_call.1} parent=5 // pred_fallthru
        _
    $region6: #{tpu_custom_call.1} parent=1 // loop_footer
      %s26 = sadd.s32 1, %s22
    $region7: #{tpu_custom_call.1} parent=1 // loop_footer_branch
      %21 = sbr.rel target = $region3
    $region8: #{tpu_custom_call.1} parent=1 // loop_exit
      _
    %1741 = vsyncpa [#allocation3], 1
    %s1742 = scalar_lea.sflag [#allocation3], 1
    %1743 = vsyncpa %s1742, 1
    %1744 = vsyncpa [#allocation6], 1
    %s1745 = scalar_lea.sflag [#allocation6], 1
    %1746 = vsyncpa %s1745, 1
    %1747 = vsyncpa [#allocation9], 1
    %s1748 = scalar_lea.sflag [#allocation9], 1
    %1749 = vsyncpa %s1748, 1
    %1750 = vsyncpa [#allocation4], 1
    %s1751 = scalar_lea.sflag [#allocation4], 1
    %1752 = vsyncpa %s1751, 1

</llo_original>
